<compile_context>
chip_gen: v7x
topology: tpu7x:2x2x1
jax: 0.10.0
libtpu: 0.0.40
codegen_flags: <defaults>
</compile_context>

<pallas_src>
import functools

import jax
import jax.numpy as jnp
from jax import lax
from jax.experimental import pallas as pl
from jax.experimental.pallas import tpu as pltpu

C1, C2 = 16, 32  # conv channel counts fixed by the PyTorch module


# ------------------------------ fused kernel -------------------------------

def _fused_kernel(x1_ref, w1_ref, b1_ref, w2_ref, b2_ref,
                  wf1_ref, bf1_ref, wf2_ref, bf2_ref, wf3_ref, bf3_ref,
                  o_ref, p1_s, *, cfg):
  """Entire forward pass for ONE image (one grid step)."""
  f32 = jnp.float32
  Hh, Wh = cfg["Hh"], cfg["Wh"]          # spatial size after pool1
  Hq, Wq = cfg["Hq"], cfg["Wq"]          # spatial size after pool2
  R1 = Wh * Hh                           # pool1-grid pixels per image

  # ---- conv1 + bn1 + relu + pool1 ------------------------------------------
  # x1 rows: g*R1 + x1*Hh + y1 with g = (x%2)*2 + (y%2) the 2x2-window member;
  # columns: the 9 conv taps.  One K=9 matmul yields all four window members;
  # pool1 is the max of the four contiguous row groups (relu/bias commute).
  x1 = x1_ref[0]                                                  # (4*R1, 9)
  a1 = jnp.dot(x1, w1_ref[...], preferred_element_type=f32)       # (4*R1, C1)
  a1 = jnp.maximum(a1 + b1_ref[...], 0.0)                         # bn1 + relu
  p1 = jnp.maximum(jnp.maximum(a1[0 * R1:1 * R1], a1[1 * R1:2 * R1]),
                   jnp.maximum(a1[2 * R1:3 * R1], a1[3 * R1:4 * R1]))  # (R1, C1)

  # Scatter pooled activations into a zero-padded (x, y, c) slab so conv2's
  # im2col below uses only static contiguous slices (no strided accesses).
  p1_s[...] = jnp.zeros_like(p1_s)
  for xi in range(Wh):
    p1_s[xi + 1, 1:Hh + 1, :] = p1[xi * Hh:(xi + 1) * Hh, :]

  # ---- conv2 + bn2 + relu + pool2(x) ---------------------------------------
  # One im2col matmul (K = 9*C1 = 144) per output-x parity; the max of the two
  # results IS the x-direction of pool2.
  w2 = w2_ref[...]                                                # (144, C2)
  acc = None
  for px in range(2):
    row_blocks = []
    for X in range(Wq):
      taps = [p1_s[2 * X + px + dx, dy:dy + Hh, :]
              for dy in range(3) for dx in range(3)]              # 9 x (Hh, C1)
      row_blocks.append(jnp.concatenate(taps, axis=-1))           # (Hh, 144)
    slab = jnp.concatenate(row_blocks, axis=0)                    # (Wq*Hh, 144)
    out_px = jnp.dot(slab.astype(w2.dtype), w2,
                     preferred_element_type=f32)                  # (Wq*Hh, C2)
    acc = out_px if acc is None else jnp.maximum(acc, out_px)
  xm = jnp.maximum(acc + b2_ref[...], 0.0)                        # bn2 + relu

  # ---- pool2(y) + flatten ----------------------------------------------------
  # 16 static single-row maxes, concatenated into the lane-dense fc1 input.
  # The NCHW flatten permutation is folded into wf1's row layout on the host.
  pieces = []
  for X in range(Wq):
    for Y in range(Hq):
      r0 = X * Hh + 2 * Y
      pieces.append(jnp.maximum(xm[r0:r0 + 1, :], xm[r0 + 1:r0 + 2, :]))
  flat = jnp.concatenate(pieces, axis=-1)                         # (1, Wq*Hq*C2)

  # ---- fc1 + bn3 + relu (dropout1 = identity in eval) ------------------------
  wf1 = wf1_ref[...]
  h = jnp.dot(flat.astype(wf1.dtype), wf1, preferred_element_type=f32)
  h = jnp.maximum(h + bf1_ref[...], 0.0)
  # ---- fc2 + bn4 + relu (dropout2 = identity in eval) ------------------------
  wf2 = wf2_ref[...]
  h = jnp.dot(h.astype(wf2.dtype), wf2, preferred_element_type=f32)
  h = jnp.maximum(h + bf2_ref[...], 0.0)
  # ---- fc3 -------------------------------------------------------------------
  wf3 = wf3_ref[...]
  out = jnp.dot(h.astype(wf3.dtype), wf3, preferred_element_type=f32)
  o_ref[0] = out + bf3_ref[...]


# ------------------------- host-side constant folding ----------------------

def prepare(params, input_shape, hidden_sizes, output_size,
            *, eps=1e-5, weight_dtype=jnp.bfloat16):
  """Fold eval-mode BatchNorm into weights/biases, pre-lay-out everything."""
  c_in, H, W = input_shape
  assert c_in == 1, "module hard-wires conv1 to a single input channel"
  assert H % 4 == 0 and W % 4 == 0, "two 2x2 maxpools need H, W divisible by 4"
  HID1, HID2 = hidden_sizes
  Hh, Wh, Hq, Wq = H // 2, W // 2, H // 4, W // 4

  def bn_affine(bn):
    scale = bn["gamma"] / jnp.sqrt(bn["var"] + eps)
    return scale, bn["beta"] - bn["mean"] * scale

  s1, t1 = bn_affine(params["bn1"])
  w1 = jnp.transpose(params["conv1_w"][:, 0] * s1[:, None, None], (1, 2, 0))
  w1 = w1.reshape(9, C1)                                     # [(dy,dx), c]
  b1 = (s1 * params["conv1_b"] + t1).reshape(1, C1)

  s2, t2 = bn_affine(params["bn2"])
  w2 = jnp.transpose(params["conv2_w"] * s2[:, None, None, None], (2, 3, 1, 0))
  w2 = w2.reshape(9 * C1, C2)                                # [(dy,dx,ci), c2]
  b2 = (s2 * params["conv2_b"] + t2).reshape(1, C2)

  s3, t3 = bn_affine(params["bn3"])
  # kernel flatten order is (x2, y2, c2); torch NCHW flatten is (c2, y2, x2).
  f1 = params["fc1_w"].reshape(HID1, C2, Hq, Wq)
  wf1 = jnp.transpose(f1, (3, 2, 1, 0)).reshape(Wq * Hq * C2, HID1) * s3[None, :]
  bf1 = (s3 * params["fc1_b"] + t3).reshape(1, HID1)

  s4, t4 = bn_affine(params["bn4"])
  wf2 = params["fc2_w"].T * s4[None, :]
  bf2 = (s4 * params["fc2_b"] + t4).reshape(1, HID2)

  wf3 = params["fc3_w"].T
  bf3 = params["fc3_b"].reshape(1, output_size)

  cfg = dict(H=H, W=W, Hh=Hh, Wh=Wh, Hq=Hq, Wq=Wq,
             HID1=HID1, HID2=HID2, OUT=output_size)
  weights = dict(
      w1=w1.astype(jnp.float32), b1=b1.astype(jnp.float32),
      w2=w2.astype(weight_dtype), b2=b2.astype(jnp.float32),
      wf1=wf1.astype(weight_dtype), bf1=bf1.astype(jnp.float32),
      wf2=wf2.astype(weight_dtype), bf2=bf2.astype(jnp.float32),
      wf3=wf3.astype(weight_dtype), bf3=bf3.astype(jnp.float32))
  return cfg, weights


def conv1_im2col(x_nchw, cfg):
  """Host-side layout glue: zero-pad and rearrange the single-channel input
  into conv1's im2col slab.  Rows: g*(Wh*Hh) + x1*Hh + y1 with
  g = (x%2)*2 + (y%2) (2x2 pool-window member); columns: the 9 conv taps."""
  H, W, Hh, Wh = cfg["H"], cfg["W"], cfg["Hh"], cfg["Wh"]
  N = x_nchw.shape[0]
  img = x_nchw.reshape(N, H, W).astype(jnp.float32)
  pad = jnp.pad(img, ((0, 0), (1, 1), (1, 1)))
  groups = []
  for px in range(2):
    for py in range(2):
      taps = []
      for dy in range(3):
        for dx in range(3):
          blk = pad[:, py + dy: py + dy + H: 2, px + dx: px + dx + W: 2]
          taps.append(jnp.transpose(blk, (0, 2, 1)).reshape(N, Wh * Hh))
      groups.append(jnp.stack(taps, axis=-1))                 # (N, Wh*Hh, 9)
  return jnp.concatenate(groups, axis=1)                      # (N, 4*Wh*Hh, 9)


# ------------------------------- forward -----------------------------------

def fused_forward(cfg, weights, x_nchw):
  N = x_nchw.shape[0]
  OUT = cfg["OUT"]
  x1 = conv1_im2col(x_nchw, cfg)
  R4 = x1.shape[1]                       # 4 * Wh * Hh

  ws = [weights[k] for k in
        ("w1", "b1", "w2", "b2", "wf1", "bf1", "wf2", "bf2", "wf3", "bf3")]
  in_specs = ([pl.BlockSpec((1, R4, 9), lambda n: (n, 0, 0))]
              + [pl.BlockSpec(tuple(w.shape), lambda n: (0, 0)) for w in ws])

  flops = 2 * N * (R4 * 9 * C1
                   + 2 * (cfg["Wq"] * cfg["Hh"]) * 9 * C1 * C2
                   + cfg["Wq"] * cfg["Hq"] * C2 * cfg["HID1"]
                   + cfg["HID1"] * cfg["HID2"]
                   + cfg["HID2"] * OUT)
  bytes_accessed = (int(x1.size) * x1.dtype.itemsize
                    + sum(int(w.size) * w.dtype.itemsize for w in ws)
                    + N * OUT * 4)

  out = pl.pallas_call(
      functools.partial(_fused_kernel, cfg=cfg),
      out_shape=jax.ShapeDtypeStruct((N, 1, OUT), jnp.float32),
      grid=(N,),
      in_specs=in_specs,
      out_specs=pl.BlockSpec((1, 1, OUT), lambda n: (n, 0, 0)),
      scratch_shapes=[
          pltpu.VMEM((cfg["Wh"] + 2, cfg["Hh"] + 2, C1), jnp.float32),
      ],
      compiler_params=pltpu.CompilerParams(
          dimension_semantics=("parallel",)),
      cost_estimate=pl.CostEstimate(flops=flops, transcendentals=0,
                                    bytes_accessed=bytes_accessed),
  )(x1, *ws)
  return out[:, 0, :]


# --------------------------- pure-JAX reference ----------------------------

def reference_forward(params, x_nchw, eps=1e-5):
  x = x_nchw.astype(jnp.float32)

  def bn2d(y, bn):
    scale = bn["gamma"] / jnp.sqrt(bn["var"] + eps)
    shift = bn["beta"] - bn["mean"] * scale
    return y * scale.reshape(1, -1, 1, 1) + shift.reshape(1, -1, 1, 1)

  def bn1d(y, bn):
    scale = bn["gamma"] / jnp.sqrt(bn["var"] + eps)
    shift = bn["beta"] - bn["mean"] * scale
    return y * scale[None, :] + shift[None, :]

  def maxpool(y):
    return lax.reduce_window(y, -jnp.inf, lax.max,
                             (1, 1, 2, 2), (1, 1, 2, 2), "VALID")

  dn = ("NCHW", "OIHW", "NCHW")
  with jax.default_matmul_precision("highest"):
    y = lax.conv_general_dilated(x, params["conv1_w"], (1, 1), "SAME",
                                 dimension_numbers=dn)
    y = y + params["conv1_b"].reshape(1, -1, 1, 1)
    y = maxpool(jnp.maximum(bn2d(y, params["bn1"]), 0.0))
    y = lax.conv_general_dilated(y, params["conv2_w"], (1, 1), "SAME",
                                 dimension_numbers=dn)
    y = y + params["conv2_b"].reshape(1, -1, 1, 1)
    y = maxpool(jnp.maximum(bn2d(y, params["bn2"]), 0.0))
    flat = y.reshape(y.shape[0], -1)
    h = jnp.maximum(bn1d(flat @ params["fc1_w"].T + params["fc1_b"],
                         params["bn3"]), 0.0)
    h = jnp.maximum(bn1d(h @ params["fc2_w"].T + params["fc2_b"],
                         params["bn4"]), 0.0)
    return h @ params["fc3_w"].T + params["fc3_b"]


# ------------------------------ param init ---------------------------------

def init_params(key, input_shape, hidden_sizes, output_size):
  c_in, H, W = input_shape
  flattened = 32 * (H // 4) * (W // 4)
  keys = jax.random.split(key, 16)

  def bn(k, c):
    k1, k2, k3, k4 = jax.random.split(k, 4)
    return dict(
        gamma=1.0 + 0.1 * jax.random.normal(k1, (c,), jnp.float32),
        beta=0.1 * jax.random.normal(k2, (c,), jnp.float32),
        mean=0.05 * jax.random.normal(k3, (c,), jnp.float32),
        var=0.5 + jax.random.uniform(k4, (c,), jnp.float32),
    )

  return dict(
      conv1_w=0.2 * jax.random.normal(keys[0], (16, c_in, 3, 3), jnp.float32),
      conv1_b=0.05 * jax.random.normal(keys[1], (16,), jnp.float32),
      bn1=bn(keys[2], 16),
      conv2_w=0.1 * jax.random.normal(keys[3], (32, 16, 3, 3), jnp.float32),
      conv2_b=0.05 * jax.random.normal(keys[4], (32,), jnp.float32),
      bn2=bn(keys[5], 32),
      fc1_w=0.05 * jax.random.normal(keys[6], (hidden_sizes[0], flattened), jnp.float32),
      fc1_b=0.05 * jax.random.normal(keys[7], (hidden_sizes[0],), jnp.float32),
      bn3=bn(keys[8], hidden_sizes[0]),
      fc2_w=0.1 * jax.random.normal(keys[9], (hidden_sizes[1], hidden_sizes[0]), jnp.float32),
      fc2_b=0.05 * jax.random.normal(keys[10], (hidden_sizes[1],), jnp.float32),
      bn4=bn(keys[11], hidden_sizes[1]),
      fc3_w=0.1 * jax.random.normal(keys[12], (output_size, hidden_sizes[1]), jnp.float32),
      fc3_b=0.05 * jax.random.normal(keys[13], (output_size,), jnp.float32),
  )


if __name__ == "__main__":
  key = jax.random.PRNGKey(0)
  input_shape = (1, 16, 16)        # (C, H, W); conv1 is hard-wired to 1 channel
  hidden_sizes = (64, 32)
  output_size = 10
  batch = 2

  pkey, xkey = jax.random.split(key)
  params = init_params(pkey, input_shape, hidden_sizes, output_size)
  x = jax.random.normal(xkey, (batch,) + input_shape, jnp.float32)   # NCHW

  ref = reference_forward(params, x)

  # f32-weight run: tight correctness check (catches layout / BN-fold bugs).
  cfg32, w32 = prepare(params, input_shape, hidden_sizes, output_size,
                       weight_dtype=jnp.float32)
  fwd32 = jax.jit(functools.partial(fused_forward, cfg32))
  out32 = fwd32(w32, x)
  jax.block_until_ready(out32)
  assert out32.shape == (batch, output_size), out32.shape
  assert bool(jnp.all(jnp.isfinite(out32)))
  err32 = float(jnp.max(jnp.abs(out32 - ref)))
  assert err32 < 2e-3, f"f32 kernel mismatch vs reference: max abs err {err32}"

  # bf16-weight run: the performance configuration (halved constant DMA).
  cfg16, w16 = prepare(params, input_shape, hidden_sizes, output_size,
                       weight_dtype=jnp.bfloat16)
  fwd16 = jax.jit(functools.partial(fused_forward, cfg16))
  out16 = fwd16(w16, x)
  jax.block_until_ready(out16)
  assert bool(jnp.all(jnp.isfinite(out16)))
  err16 = float(jnp.max(jnp.abs(out16 - ref)))
  assert err16 < 1.5e-1, f"bf16 kernel mismatch vs reference: max abs err {err16}"

  print("KERNEL_OK")
</pallas_src>

<mosaic_0001>
module attributes {stable_mosaic.version = 11 : i64} {
  func.func @_fused_kernel(%arg0: i32, %arg1: memref<1x256x9xf32, #tpu.memory_space<vmem>>, %arg2: memref<9x16xf32, #tpu.memory_space<vmem>>, %arg3: memref<1x16xf32, #tpu.memory_space<vmem>>, %arg4: memref<144x32xf32, #tpu.memory_space<vmem>>, %arg5: memref<1x32xf32, #tpu.memory_space<vmem>>, %arg6: memref<512x64xf32, #tpu.memory_space<vmem>>, %arg7: memref<1x64xf32, #tpu.memory_space<vmem>>, %arg8: memref<64x32xf32, #tpu.memory_space<vmem>>, %arg9: memref<1x32xf32, #tpu.memory_space<vmem>>, %arg10: memref<32x10xf32, #tpu.memory_space<vmem>>, %arg11: memref<1x10xf32, #tpu.memory_space<vmem>>, %arg12: memref<1x1x10xf32, #tpu.memory_space<vmem>>, %arg13: memref<10x10x16xf32, #tpu.memory_space<vmem>>) attributes {dimension_semantics = [#tpu.dimension_semantics<parallel>], iteration_bounds = array<i64: 2>, scalar_prefetch = 0 : i64, scratch_operands = 1 : i64, tpu.core_type = #tpu.core_type<tc>, window_params = [{transform_indices = @transform_0, window_bounds = array<i64: 1, 256, 9>}, {pipeline_mode = #tpu.pipeline_mode<synchronous>, transform_indices = @transform_1, window_bounds = array<i64: 9, 16>}, {pipeline_mode = #tpu.pipeline_mode<synchronous>, transform_indices = @transform_2, window_bounds = array<i64: 1, 16>}, {pipeline_mode = #tpu.pipeline_mode<synchronous>, transform_indices = @transform_3, window_bounds = array<i64: 144, 32>}, {pipeline_mode = #tpu.pipeline_mode<synchronous>, transform_indices = @transform_4, window_bounds = array<i64: 1, 32>}, {pipeline_mode = #tpu.pipeline_mode<synchronous>, transform_indices = @transform_5, window_bounds = array<i64: 512, 64>}, {pipeline_mode = #tpu.pipeline_mode<synchronous>, transform_indices = @transform_6, window_bounds = array<i64: 1, 64>}, {pipeline_mode = #tpu.pipeline_mode<synchronous>, transform_indices = @transform_7, window_bounds = array<i64: 64, 32>}, {pipeline_mode = #tpu.pipeline_mode<synchronous>, transform_indices = @transform_8, window_bounds = array<i64: 1, 32>}, {pipeline_mode = #tpu.pipeline_mode<synchronous>, transform_indices = @transform_9, window_bounds = array<i64: 32, 10>}, {pipeline_mode = #tpu.pipeline_mode<synchronous>, transform_indices = @transform_10, window_bounds = array<i64: 1, 10>}, {transform_indices = @transform_11, window_bounds = array<i64: 1, 1, 10>}]} {
    %c0 = arith.constant 0 : index
    %c0_0 = arith.constant 0 : index
    %c0_1 = arith.constant 0 : index
    %0 = vector.load %arg1[%c0, %c0_0, %c0_1] : memref<1x256x9xf32, #tpu.memory_space<vmem>>, vector<1x256x9xf32>
    %1 = vector.shape_cast %0 : vector<1x256x9xf32> to vector<256x9xf32>
    %c0_2 = arith.constant 0 : index
    %c0_3 = arith.constant 0 : index
    %2 = vector.load %arg2[%c0_2, %c0_3] : memref<9x16xf32, #tpu.memory_space<vmem>>, vector<9x16xf32>
    %cst = arith.constant dense<0.000000e+00> : vector<256x16xf32>
    %3 = tpu.matmul %1, %2, %cst {dimension_numbers = #tpu.dot_dimension_numbers<[1], [0], [0], [1], [0, 0, 1, 1], [], []>} : vector<256x9xf32>, vector<9x16xf32>, vector<256x16xf32> -> vector<256x16xf32>
    %c0_4 = arith.constant 0 : index
    %c0_5 = arith.constant 0 : index
    %4 = vector.load %arg3[%c0_4, %c0_5] : memref<1x16xf32, #tpu.memory_space<vmem>>, vector<1x16xf32>
    %5 = vector.broadcast %4 : vector<1x16xf32> to vector<256x16xf32>
    %6 = arith.addf %3, %5 : vector<256x16xf32>
    %cst_6 = arith.constant 0.000000e+00 : f32
    %7 = vector.broadcast %cst_6 : f32 to vector<256x16xf32>
    %8 = arith.maximumf %6, %7 : vector<256x16xf32>
    %9 = vector.extract_strided_slice %8 {offsets = [0, 0], sizes = [64, 16], strides = [1, 1]} : vector<256x16xf32> to vector<64x16xf32>
    %10 = vector.extract_strided_slice %8 {offsets = [64, 0], sizes = [64, 16], strides = [1, 1]} : vector<256x16xf32> to vector<64x16xf32>
    %11 = arith.maximumf %9, %10 : vector<64x16xf32>
    %12 = vector.extract_strided_slice %8 {offsets = [128, 0], sizes = [64, 16], strides = [1, 1]} : vector<256x16xf32> to vector<64x16xf32>
    %13 = vector.extract_strided_slice %8 {offsets = [192, 0], sizes = [64, 16], strides = [1, 1]} : vector<256x16xf32> to vector<64x16xf32>
    %14 = arith.maximumf %12, %13 : vector<64x16xf32>
    %15 = arith.maximumf %11, %14 : vector<64x16xf32>
    %cst_7 = arith.constant 0.000000e+00 : f32
    %16 = vector.broadcast %cst_7 : f32 to vector<10x10x16xf32>
    %c0_8 = arith.constant 0 : index
    %c0_9 = arith.constant 0 : index
    %c0_10 = arith.constant 0 : index
    %17 = vector.load %arg13[%c0_8, %c0_9, %c0_10] : memref<10x10x16xf32, #tpu.memory_space<vmem>>, vector<10x10x16xf32>
    tpu.vector_store %arg13[%c0_8, %c0_9, %c0_10], %16 {strides = array<i32>} : memref<10x10x16xf32, #tpu.memory_space<vmem>>, vector<10x10x16xf32>,
    %18 = vector.extract_strided_slice %15 {offsets = [0, 0], sizes = [8, 16], strides = [1, 1]} : vector<64x16xf32> to vector<8x16xf32>
    %c1 = arith.constant 1 : index
    %c1_11 = arith.constant 1 : index
    %c0_12 = arith.constant 0 : index
    %19 = vector.load %arg13[%c1, %c1_11, %c0_12] : memref<10x10x16xf32, #tpu.memory_space<vmem>>, vector<1x8x16xf32>
    %20 = vector.shape_cast %19 : vector<1x8x16xf32> to vector<8x16xf32>
    %21 = vector.shape_cast %18 : vector<8x16xf32> to vector<1x8x16xf32>
    tpu.vector_store %arg13[%c1, %c1_11, %c0_12], %21 {strides = array<i32>} : memref<10x10x16xf32, #tpu.memory_space<vmem>>, vector<1x8x16xf32>,
    %22 = vector.extract_strided_slice %15 {offsets = [8, 0], sizes = [8, 16], strides = [1, 1]} : vector<64x16xf32> to vector<8x16xf32>
    %c2 = arith.constant 2 : index
    %c1_13 = arith.constant 1 : index
    %c0_14 = arith.constant 0 : index
    %23 = vector.load %arg13[%c2, %c1_13, %c0_14] : memref<10x10x16xf32, #tpu.memory_space<vmem>>, vector<1x8x16xf32>
    %24 = vector.shape_cast %23 : vector<1x8x16xf32> to vector<8x16xf32>
    %25 = vector.shape_cast %22 : vector<8x16xf32> to vector<1x8x16xf32>
    tpu.vector_store %arg13[%c2, %c1_13, %c0_14], %25 {strides = array<i32>} : memref<10x10x16xf32, #tpu.memory_space<vmem>>, vector<1x8x16xf32>,
    %26 = vector.extract_strided_slice %15 {offsets = [16, 0], sizes = [8, 16], strides = [1, 1]} : vector<64x16xf32> to vector<8x16xf32>
    %c3 = arith.constant 3 : index
    %c1_15 = arith.constant 1 : index
    %c0_16 = arith.constant 0 : index
    %27 = vector.load %arg13[%c3, %c1_15, %c0_16] : memref<10x10x16xf32, #tpu.memory_space<vmem>>, vector<1x8x16xf32>
    %28 = vector.shape_cast %27 : vector<1x8x16xf32> to vector<8x16xf32>
    %29 = vector.shape_cast %26 : vector<8x16xf32> to vector<1x8x16xf32>
    tpu.vector_store %arg13[%c3, %c1_15, %c0_16], %29 {strides = array<i32>} : memref<10x10x16xf32, #tpu.memory_space<vmem>>, vector<1x8x16xf32>,
    %30 = vector.extract_strided_slice %15 {offsets = [24, 0], sizes = [8, 16], strides = [1, 1]} : vector<64x16xf32> to vector<8x16xf32>
    %c4 = arith.constant 4 : index
    %c1_17 = arith.constant 1 : index
    %c0_18 = arith.constant 0 : index
    %31 = vector.load %arg13[%c4, %c1_17, %c0_18] : memref<10x10x16xf32, #tpu.memory_space<vmem>>, vector<1x8x16xf32>
    %32 = vector.shape_cast %31 : vector<1x8x16xf32> to vector<8x16xf32>
    %33 = vector.shape_cast %30 : vector<8x16xf32> to vector<1x8x16xf32>
    tpu.vector_store %arg13[%c4, %c1_17, %c0_18], %33 {strides = array<i32>} : memref<10x10x16xf32, #tpu.memory_space<vmem>>, vector<1x8x16xf32>,
    %34 = vector.extract_strided_slice %15 {offsets = [32, 0], sizes = [8, 16], strides = [1, 1]} : vector<64x16xf32> to vector<8x16xf32>
    %c5 = arith.constant 5 : index
    %c1_19 = arith.constant 1 : index
    %c0_20 = arith.constant 0 : index
    %35 = vector.load %arg13[%c5, %c1_19, %c0_20] : memref<10x10x16xf32, #tpu.memory_space<vmem>>, vector<1x8x16xf32>
    %36 = vector.shape_cast %35 : vector<1x8x16xf32> to vector<8x16xf32>
    %37 = vector.shape_cast %34 : vector<8x16xf32> to vector<1x8x16xf32>
    tpu.vector_store %arg13[%c5, %c1_19, %c0_20], %37 {strides = array<i32>} : memref<10x10x16xf32, #tpu.memory_space<vmem>>, vector<1x8x16xf32>,
    %38 = vector.extract_strided_slice %15 {offsets = [40, 0], sizes = [8, 16], strides = [1, 1]} : vector<64x16xf32> to vector<8x16xf32>
    %c6 = arith.constant 6 : index
    %c1_21 = arith.constant 1 : index
    %c0_22 = arith.constant 0 : index
    %39 = vector.load %arg13[%c6, %c1_21, %c0_22] : memref<10x10x16xf32, #tpu.memory_space<vmem>>, vector<1x8x16xf32>
    %40 = vector.shape_cast %39 : vector<1x8x16xf32> to vector<8x16xf32>
    %41 = vector.shape_cast %38 : vector<8x16xf32> to vector<1x8x16xf32>
    tpu.vector_store %arg13[%c6, %c1_21, %c0_22], %41 {strides = array<i32>} : memref<10x10x16xf32, #tpu.memory_space<vmem>>, vector<1x8x16xf32>,
    %42 = vector.extract_strided_slice %15 {offsets = [48, 0], sizes = [8, 16], strides = [1, 1]} : vector<64x16xf32> to vector<8x16xf32>
    %c7 = arith.constant 7 : index
    %c1_23 = arith.constant 1 : index
    %c0_24 = arith.constant 0 : index
    %43 = vector.load %arg13[%c7, %c1_23, %c0_24] : memref<10x10x16xf32, #tpu.memory_space<vmem>>, vector<1x8x16xf32>
    %44 = vector.shape_cast %43 : vector<1x8x16xf32> to vector<8x16xf32>
    %45 = vector.shape_cast %42 : vector<8x16xf32> to vector<1x8x16xf32>
    tpu.vector_store %arg13[%c7, %c1_23, %c0_24], %45 {strides = array<i32>} : memref<10x10x16xf32, #tpu.memory_space<vmem>>, vector<1x8x16xf32>,
    %46 = vector.extract_strided_slice %15 {offsets = [56, 0], sizes = [8, 16], strides = [1, 1]} : vector<64x16xf32> to vector<8x16xf32>
    %c8 = arith.constant 8 : index
    %c1_25 = arith.constant 1 : index
    %c0_26 = arith.constant 0 : index
    %47 = vector.load %arg13[%c8, %c1_25, %c0_26] : memref<10x10x16xf32, #tpu.memory_space<vmem>>, vector<1x8x16xf32>
    %48 = vector.shape_cast %47 : vector<1x8x16xf32> to vector<8x16xf32>
    %49 = vector.shape_cast %46 : vector<8x16xf32> to vector<1x8x16xf32>
    tpu.vector_store %arg13[%c8, %c1_25, %c0_26], %49 {strides = array<i32>} : memref<10x10x16xf32, #tpu.memory_space<vmem>>, vector<1x8x16xf32>,
    %c0_27 = arith.constant 0 : index
    %c0_28 = arith.constant 0 : index
    %50 = vector.load %arg4[%c0_27, %c0_28] : memref<144x32xf32, #tpu.memory_space<vmem>>, vector<144x32xf32>
    %c0_29 = arith.constant 0 : index
    %c0_30 = arith.constant 0 : index
    %c0_31 = arith.constant 0 : index
    %51 = vector.load %arg13[%c0_29, %c0_30, %c0_31] : memref<10x10x16xf32, #tpu.memory_space<vmem>>, vector<1x8x16xf32>
    %52 = vector.shape_cast %51 : vector<1x8x16xf32> to vector<8x16xf32>
    %c1_32 = arith.constant 1 : index
    %c0_33 = arith.constant 0 : index
    %c0_34 = arith.constant 0 : index
    %53 = vector.load %arg13[%c1_32, %c0_33, %c0_34] : memref<10x10x16xf32, #tpu.memory_space<vmem>>, vector<1x8x16xf32>
    %54 = vector.shape_cast %53 : vector<1x8x16xf32> to vector<8x16xf32>
    %c2_35 = arith.constant 2 : index
    %c0_36 = arith.constant 0 : index
    %c0_37 = arith.constant 0 : index
    %55 = vector.load %arg13[%c2_35, %c0_36, %c0_37] : memref<10x10x16xf32, #tpu.memory_space<vmem>>, vector<1x8x16xf32>
    %56 = vector.shape_cast %55 : vector<1x8x16xf32> to vector<8x16xf32>
    %c0_38 = arith.constant 0 : index
    %c1_39 = arith.constant 1 : index
    %c0_40 = arith.constant 0 : index
    %57 = vector.load %arg13[%c0_38, %c1_39, %c0_40] : memref<10x10x16xf32, #tpu.memory_space<vmem>>, vector<1x8x16xf32>
    %58 = vector.shape_cast %57 : vector<1x8x16xf32> to vector<8x16xf32>
    %c1_41 = arith.constant 1 : index
    %c1_42 = arith.constant 1 : index
    %c0_43 = arith.constant 0 : index
    %59 = vector.load %arg13[%c1_41, %c1_42, %c0_43] : memref<10x10x16xf32, #tpu.memory_space<vmem>>, vector<1x8x16xf32>
    %60 = vector.shape_cast %59 : vector<1x8x16xf32> to vector<8x16xf32>
    %c2_44 = arith.constant 2 : index
    %c1_45 = arith.constant 1 : index
    %c0_46 = arith.constant 0 : index
    %61 = vector.load %arg13[%c2_44, %c1_45, %c0_46] : memref<10x10x16xf32, #tpu.memory_space<vmem>>, vector<1x8x16xf32>
    %62 = vector.shape_cast %61 : vector<1x8x16xf32> to vector<8x16xf32>
    %c0_47 = arith.constant 0 : index
    %c2_48 = arith.constant 2 : index
    %c0_49 = arith.constant 0 : index
    %63 = vector.load %arg13[%c0_47, %c2_48, %c0_49] : memref<10x10x16xf32, #tpu.memory_space<vmem>>, vector<1x8x16xf32>
    %64 = vector.shape_cast %63 : vector<1x8x16xf32> to vector<8x16xf32>
    %c1_50 = arith.constant 1 : index
    %c2_51 = arith.constant 2 : index
    %c0_52 = arith.constant 0 : index
    %65 = vector.load %arg13[%c1_50, %c2_51, %c0_52] : memref<10x10x16xf32, #tpu.memory_space<vmem>>, vector<1x8x16xf32>
    %66 = vector.shape_cast %65 : vector<1x8x16xf32> to vector<8x16xf32>
    %c2_53 = arith.constant 2 : index
    %c2_54 = arith.constant 2 : index
    %c0_55 = arith.constant 0 : index
    %67 = vector.load %arg13[%c2_53, %c2_54, %c0_55] : memref<10x10x16xf32, #tpu.memory_space<vmem>>, vector<1x8x16xf32>
    %68 = vector.shape_cast %67 : vector<1x8x16xf32> to vector<8x16xf32>
    %69 = tpu.concatenate %52, %54, %56, %58, %60, %62, %64, %66, %68 in 1 : vector<8x16xf32>, vector<8x16xf32>, vector<8x16xf32>, vector<8x16xf32>, vector<8x16xf32>, vector<8x16xf32>, vector<8x16xf32>, vector<8x16xf32>, vector<8x16xf32> -> vector<8x144xf32>
    %c2_56 = arith.constant 2 : index
    %c0_57 = arith.constant 0 : index
    %c0_58 = arith.constant 0 : index
    %70 = vector.load %arg13[%c2_56, %c0_57, %c0_58] : memref<10x10x16xf32, #tpu.memory_space<vmem>>, vector<1x8x16xf32>
    %71 = vector.shape_cast %70 : vector<1x8x16xf32> to vector<8x16xf32>
    %c3_59 = arith.constant 3 : index
    %c0_60 = arith.constant 0 : index
    %c0_61 = arith.constant 0 : index
    %72 = vector.load %arg13[%c3_59, %c0_60, %c0_61] : memref<10x10x16xf32, #tpu.memory_space<vmem>>, vector<1x8x16xf32>
    %73 = vector.shape_cast %72 : vector<1x8x16xf32> to vector<8x16xf32>
    %c4_62 = arith.constant 4 : index
    %c0_63 = arith.constant 0 : index
    %c0_64 = arith.constant 0 : index
    %74 = vector.load %arg13[%c4_62, %c0_63, %c0_64] : memref<10x10x16xf32, #tpu.memory_space<vmem>>, vector<1x8x16xf32>
    %75 = vector.shape_cast %74 : vector<1x8x16xf32> to vector<8x16xf32>
    %c2_65 = arith.constant 2 : index
    %c1_66 = arith.constant 1 : index
    %c0_67 = arith.constant 0 : index
    %76 = vector.load %arg13[%c2_65, %c1_66, %c0_67] : memref<10x10x16xf32, #tpu.memory_space<vmem>>, vector<1x8x16xf32>
    %77 = vector.shape_cast %76 : vector<1x8x16xf32> to vector<8x16xf32>
    %c3_68 = arith.constant 3 : index
    %c1_69 = arith.constant 1 : index
    %c0_70 = arith.constant 0 : index
    %78 = vector.load %arg13[%c3_68, %c1_69, %c0_70] : memref<10x10x16xf32, #tpu.memory_space<vmem>>, vector<1x8x16xf32>
    %79 = vector.shape_cast %78 : vector<1x8x16xf32> to vector<8x16xf32>
    %c4_71 = arith.constant 4 : index
    %c1_72 = arith.constant 1 : index
    %c0_73 = arith.constant 0 : index
    %80 = vector.load %arg13[%c4_71, %c1_72, %c0_73] : memref<10x10x16xf32, #tpu.memory_space<vmem>>, vector<1x8x16xf32>
    %81 = vector.shape_cast %80 : vector<1x8x16xf32> to vector<8x16xf32>
    %c2_74 = arith.constant 2 : index
    %c2_75 = arith.constant 2 : index
    %c0_76 = arith.constant 0 : index
    %82 = vector.load %arg13[%c2_74, %c2_75, %c0_76] : memref<10x10x16xf32, #tpu.memory_space<vmem>>, vector<1x8x16xf32>
    %83 = vector.shape_cast %82 : vector<1x8x16xf32> to vector<8x16xf32>
    %c3_77 = arith.constant 3 : index
    %c2_78 = arith.constant 2 : index
    %c0_79 = arith.constant 0 : index
    %84 = vector.load %arg13[%c3_77, %c2_78, %c0_79] : memref<10x10x16xf32, #tpu.memory_space<vmem>>, vector<1x8x16xf32>
    %85 = vector.shape_cast %84 : vector<1x8x16xf32> to vector<8x16xf32>
    %c4_80 = arith.constant 4 : index
    %c2_81 = arith.constant 2 : index
    %c0_82 = arith.constant 0 : index
    %86 = vector.load %arg13[%c4_80, %c2_81, %c0_82] : memref<10x10x16xf32, #tpu.memory_space<vmem>>, vector<1x8x16xf32>
    %87 = vector.shape_cast %86 : vector<1x8x16xf32> to vector<8x16xf32>
    %88 = tpu.concatenate %71, %73, %75, %77, %79, %81, %83, %85, %87 in 1 : vector<8x16xf32>, vector<8x16xf32>, vector<8x16xf32>, vector<8x16xf32>, vector<8x16xf32>, vector<8x16xf32>, vector<8x16xf32>, vector<8x16xf32>, vector<8x16xf32> -> vector<8x144xf32>
    %c4_83 = arith.constant 4 : index
    %c0_84 = arith.constant 0 : index
    %c0_85 = arith.constant 0 : index
    %89 = vector.load %arg13[%c4_83, %c0_84, %c0_85] : memref<10x10x16xf32, #tpu.memory_space<vmem>>, vector<1x8x16xf32>
    %90 = vector.shape_cast %89 : vector<1x8x16xf32> to vector<8x16xf32>
    %c5_86 = arith.constant 5 : index
    %c0_87 = arith.constant 0 : index
    %c0_88 = arith.constant 0 : index
    %91 = vector.load %arg13[%c5_86, %c0_87, %c0_88] : memref<10x10x16xf32, #tpu.memory_space<vmem>>, vector<1x8x16xf32>
    %92 = vector.shape_cast %91 : vector<1x8x16xf32> to vector<8x16xf32>
    %c6_89 = arith.constant 6 : index
    %c0_90 = arith.constant 0 : index
    %c0_91 = arith.constant 0 : index
    %93 = vector.load %arg13[%c6_89, %c0_90, %c0_91] : memref<10x10x16xf32, #tpu.memory_space<vmem>>, vector<1x8x16xf32>
    %94 = vector.shape_cast %93 : vector<1x8x16xf32> to vector<8x16xf32>
    %c4_92 = arith.constant 4 : index
    %c1_93 = arith.constant 1 : index
    %c0_94 = arith.constant 0 : index
    %95 = vector.load %arg13[%c4_92, %c1_93, %c0_94] : memref<10x10x16xf32, #tpu.memory_space<vmem>>, vector<1x8x16xf32>
    %96 = vector.shape_cast %95 : vector<1x8x16xf32> to vector<8x16xf32>
    %c5_95 = arith.constant 5 : index
    %c1_96 = arith.constant 1 : index
    %c0_97 = arith.constant 0 : index
    %97 = vector.load %arg13[%c5_95, %c1_96, %c0_97] : memref<10x10x16xf32, #tpu.memory_space<vmem>>, vector<1x8x16xf32>
    %98 = vector.shape_cast %97 : vector<1x8x16xf32> to vector<8x16xf32>
    %c6_98 = arith.constant 6 : index
    %c1_99 = arith.constant 1 : index
    %c0_100 = arith.constant 0 : index
    %99 = vector.load %arg13[%c6_98, %c1_99, %c0_100] : memref<10x10x16xf32, #tpu.memory_space<vmem>>, vector<1x8x16xf32>
    %100 = vector.shape_cast %99 : vector<1x8x16xf32> to vector<8x16xf32>
    %c4_101 = arith.constant 4 : index
    %c2_102 = arith.constant 2 : index
    %c0_103 = arith.constant 0 : index
    %101 = vector.load %arg13[%c4_101, %c2_102, %c0_103] : memref<10x10x16xf32, #tpu.memory_space<vmem>>, vector<1x8x16xf32>
    %102 = vector.shape_cast %101 : vector<1x8x16xf32> to vector<8x16xf32>
    %c5_104 = arith.constant 5 : index
    %c2_105 = arith.constant 2 : index
    %c0_106 = arith.constant 0 : index
    %103 = vector.load %arg13[%c5_104, %c2_105, %c0_106] : memref<10x10x16xf32, #tpu.memory_space<vmem>>, vector<1x8x16xf32>
    %104 = vector.shape_cast %103 : vector<1x8x16xf32> to vector<8x16xf32>
    %c6_107 = arith.constant 6 : index
    %c2_108 = arith.constant 2 : index
    %c0_109 = arith.constant 0 : index
    %105 = vector.load %arg13[%c6_107, %c2_108, %c0_109] : memref<10x10x16xf32, #tpu.memory_space<vmem>>, vector<1x8x16xf32>
    %106 = vector.shape_cast %105 : vector<1x8x16xf32> to vector<8x16xf32>
    %107 = tpu.concatenate %90, %92, %94, %96, %98, %100, %102, %104, %106 in 1 : vector<8x16xf32>, vector<8x16xf32>, vector<8x16xf32>, vector<8x16xf32>, vector<8x16xf32>, vector<8x16xf32>, vector<8x16xf32>, vector<8x16xf32>, vector<8x16xf32> -> vector<8x144xf32>
    %c6_110 = arith.constant 6 : index
    %c0_111 = arith.constant 0 : index
    %c0_112 = arith.constant 0 : index
    %108 = vector.load %arg13[%c6_110, %c0_111, %c0_112] : memref<10x10x16xf32, #tpu.memory_space<vmem>>, vector<1x8x16xf32>
    %109 = vector.shape_cast %108 : vector<1x8x16xf32> to vector<8x16xf32>
    %c7_113 = arith.constant 7 : index
    %c0_114 = arith.constant 0 : index
    %c0_115 = arith.constant 0 : index
    %110 = vector.load %arg13[%c7_113, %c0_114, %c0_115] : memref<10x10x16xf32, #tpu.memory_space<vmem>>, vector<1x8x16xf32>
    %111 = vector.shape_cast %110 : vector<1x8x16xf32> to vector<8x16xf32>
    %c8_116 = arith.constant 8 : index
    %c0_117 = arith.constant 0 : index
    %c0_118 = arith.constant 0 : index
    %112 = vector.load %arg13[%c8_116, %c0_117, %c0_118] : memref<10x10x16xf32, #tpu.memory_space<vmem>>, vector<1x8x16xf32>
    %113 = vector.shape_cast %112 : vector<1x8x16xf32> to vector<8x16xf32>
    %c6_119 = arith.constant 6 : index
    %c1_120 = arith.constant 1 : index
    %c0_121 = arith.constant 0 : index
    %114 = vector.load %arg13[%c6_119, %c1_120, %c0_121] : memref<10x10x16xf32, #tpu.memory_space<vmem>>, vector<1x8x16xf32>
    %115 = vector.shape_cast %114 : vector<1x8x16xf32> to vector<8x16xf32>
    %c7_122 = arith.constant 7 : index
    %c1_123 = arith.constant 1 : index
    %c0_124 = arith.constant 0 : index
    %116 = vector.load %arg13[%c7_122, %c1_123, %c0_124] : memref<10x10x16xf32, #tpu.memory_space<vmem>>, vector<1x8x16xf32>
    %117 = vector.shape_cast %116 : vector<1x8x16xf32> to vector<8x16xf32>
    %c8_125 = arith.constant 8 : index
    %c1_126 = arith.constant 1 : index
    %c0_127 = arith.constant 0 : index
    %118 = vector.load %arg13[%c8_125, %c1_126, %c0_127] : memref<10x10x16xf32, #tpu.memory_space<vmem>>, vector<1x8x16xf32>
    %119 = vector.shape_cast %118 : vector<1x8x16xf32> to vector<8x16xf32>
    %c6_128 = arith.constant 6 : index
    %c2_129 = arith.constant 2 : index
    %c0_130 = arith.constant 0 : index
    %120 = vector.load %arg13[%c6_128, %c2_129, %c0_130] : memref<10x10x16xf32, #tpu.memory_space<vmem>>, vector<1x8x16xf32>
    %121 = vector.shape_cast %120 : vector<1x8x16xf32> to vector<8x16xf32>
    %c7_131 = arith.constant 7 : index
    %c2_132 = arith.constant 2 : index
    %c0_133 = arith.constant 0 : index
    %122 = vector.load %arg13[%c7_131, %c2_132, %c0_133] : memref<10x10x16xf32, #tpu.memory_space<vmem>>, vector<1x8x16xf32>
    %123 = vector.shape_cast %122 : vector<1x8x16xf32> to vector<8x16xf32>
    %c8_134 = arith.constant 8 : index
    %c2_135 = arith.constant 2 : index
    %c0_136 = arith.constant 0 : index
    %124 = vector.load %arg13[%c8_134, %c2_135, %c0_136] : memref<10x10x16xf32, #tpu.memory_space<vmem>>, vector<1x8x16xf32>
    %125 = vector.shape_cast %124 : vector<1x8x16xf32> to vector<8x16xf32>
    %126 = tpu.concatenate %109, %111, %113, %115, %117, %119, %121, %123, %125 in 1 : vector<8x16xf32>, vector<8x16xf32>, vector<8x16xf32>, vector<8x16xf32>, vector<8x16xf32>, vector<8x16xf32>, vector<8x16xf32>, vector<8x16xf32>, vector<8x16xf32> -> vector<8x144xf32>
    %127 = tpu.concatenate %69, %88, %107, %126 in 0 : vector<8x144xf32>, vector<8x144xf32>, vector<8x144xf32>, vector<8x144xf32> -> vector<32x144xf32>
    %cst_137 = arith.constant dense<0.000000e+00> : vector<32x32xf32>
    %128 = tpu.matmul %127, %50, %cst_137 {dimension_numbers = #tpu.dot_dimension_numbers<[1], [0], [0], [1], [0, 0, 1, 1], [], []>} : vector<32x144xf32>, vector<144x32xf32>, vector<32x32xf32> -> vector<32x32xf32>
    %c1_138 = arith.constant 1 : index
    %c0_139 = arith.constant 0 : index
    %c0_140 = arith.constant 0 : index
    %129 = vector.load %arg13[%c1_138, %c0_139, %c0_140] : memref<10x10x16xf32, #tpu.memory_space<vmem>>, vector<1x8x16xf32>
    %130 = vector.shape_cast %129 : vector<1x8x16xf32> to vector<8x16xf32>
    %c2_141 = arith.constant 2 : index
    %c0_142 = arith.constant 0 : index
    %c0_143 = arith.constant 0 : index
    %131 = vector.load %arg13[%c2_141, %c0_142, %c0_143] : memref<10x10x16xf32, #tpu.memory_space<vmem>>, vector<1x8x16xf32>
    %132 = vector.shape_cast %131 : vector<1x8x16xf32> to vector<8x16xf32>
    %c3_144 = arith.constant 3 : index
    %c0_145 = arith.constant 0 : index
    %c0_146 = arith.constant 0 : index
    %133 = vector.load %arg13[%c3_144, %c0_145, %c0_146] : memref<10x10x16xf32, #tpu.memory_space<vmem>>, vector<1x8x16xf32>
    %134 = vector.shape_cast %133 : vector<1x8x16xf32> to vector<8x16xf32>
    %c1_147 = arith.constant 1 : index
    %c1_148 = arith.constant 1 : index
    %c0_149 = arith.constant 0 : index
    %135 = vector.load %arg13[%c1_147, %c1_148, %c0_149] : memref<10x10x16xf32, #tpu.memory_space<vmem>>, vector<1x8x16xf32>
    %136 = vector.shape_cast %135 : vector<1x8x16xf32> to vector<8x16xf32>
    %c2_150 = arith.constant 2 : index
    %c1_151 = arith.constant 1 : index
    %c0_152 = arith.constant 0 : index
    %137 = vector.load %arg13[%c2_150, %c1_151, %c0_152] : memref<10x10x16xf32, #tpu.memory_space<vmem>>, vector<1x8x16xf32>
    %138 = vector.shape_cast %137 : vector<1x8x16xf32> to vector<8x16xf32>
    %c3_153 = arith.constant 3 : index
    %c1_154 = arith.constant 1 : index
    %c0_155 = arith.constant 0 : index
    %139 = vector.load %arg13[%c3_153, %c1_154, %c0_155] : memref<10x10x16xf32, #tpu.memory_space<vmem>>, vector<1x8x16xf32>
    %140 = vector.shape_cast %139 : vector<1x8x16xf32> to vector<8x16xf32>
    %c1_156 = arith.constant 1 : index
    %c2_157 = arith.constant 2 : index
    %c0_158 = arith.constant 0 : index
    %141 = vector.load %arg13[%c1_156, %c2_157, %c0_158] : memref<10x10x16xf32, #tpu.memory_space<vmem>>, vector<1x8x16xf32>
    %142 = vector.shape_cast %141 : vector<1x8x16xf32> to vector<8x16xf32>
    %c2_159 = arith.constant 2 : index
    %c2_160 = arith.constant 2 : index
    %c0_161 = arith.constant 0 : index
    %143 = vector.load %arg13[%c2_159, %c2_160, %c0_161] : memref<10x10x16xf32, #tpu.memory_space<vmem>>, vector<1x8x16xf32>
    %144 = vector.shape_cast %143 : vector<1x8x16xf32> to vector<8x16xf32>
    %c3_162 = arith.constant 3 : index
    %c2_163 = arith.constant 2 : index
    %c0_164 = arith.constant 0 : index
    %145 = vector.load %arg13[%c3_162, %c2_163, %c0_164] : memref<10x10x16xf32, #tpu.memory_space<vmem>>, vector<1x8x16xf32>
    %146 = vector.shape_cast %145 : vector<1x8x16xf32> to vector<8x16xf32>
    %147 = tpu.concatenate %130, %132, %134, %136, %138, %140, %142, %144, %146 in 1 : vector<8x16xf32>, vector<8x16xf32>, vector<8x16xf32>, vector<8x16xf32>, vector<8x16xf32>, vector<8x16xf32>, vector<8x16xf32>, vector<8x16xf32>, vector<8x16xf32> -> vector<8x144xf32>
    %c3_165 = arith.constant 3 : index
    %c0_166 = arith.constant 0 : index
    %c0_167 = arith.constant 0 : index
    %148 = vector.load %arg13[%c3_165, %c0_166, %c0_167] : memref<10x10x16xf32, #tpu.memory_space<vmem>>, vector<1x8x16xf32>
    %149 = vector.shape_cast %148 : vector<1x8x16xf32> to vector<8x16xf32>
    %c4_168 = arith.constant 4 : index
    %c0_169 = arith.constant 0 : index
    %c0_170 = arith.constant 0 : index
    %150 = vector.load %arg13[%c4_168, %c0_169, %c0_170] : memref<10x10x16xf32, #tpu.memory_space<vmem>>, vector<1x8x16xf32>
    %151 = vector.shape_cast %150 : vector<1x8x16xf32> to vector<8x16xf32>
    %c5_171 = arith.constant 5 : index
    %c0_172 = arith.constant 0 : index
    %c0_173 = arith.constant 0 : index
    %152 = vector.load %arg13[%c5_171, %c0_172, %c0_173] : memref<10x10x16xf32, #tpu.memory_space<vmem>>, vector<1x8x16xf32>
    %153 = vector.shape_cast %152 : vector<1x8x16xf32> to vector<8x16xf32>
    %c3_174 = arith.constant 3 : index
    %c1_175 = arith.constant 1 : index
    %c0_176 = arith.constant 0 : index
    %154 = vector.load %arg13[%c3_174, %c1_175, %c0_176] : memref<10x10x16xf32, #tpu.memory_space<vmem>>, vector<1x8x16xf32>
    %155 = vector.shape_cast %154 : vector<1x8x16xf32> to vector<8x16xf32>
    %c4_177 = arith.constant 4 : index
    %c1_178 = arith.constant 1 : index
    %c0_179 = arith.constant 0 : index
    %156 = vector.load %arg13[%c4_177, %c1_178, %c0_179] : memref<10x10x16xf32, #tpu.memory_space<vmem>>, vector<1x8x16xf32>
    %157 = vector.shape_cast %156 : vector<1x8x16xf32> to vector<8x16xf32>
    %c5_180 = arith.constant 5 : index
    %c1_181 = arith.constant 1 : index
    %c0_182 = arith.constant 0 : index
    %158 = vector.load %arg13[%c5_180, %c1_181, %c0_182] : memref<10x10x16xf32, #tpu.memory_space<vmem>>, vector<1x8x16xf32>
    %159 = vector.shape_cast %158 : vector<1x8x16xf32> to vector<8x16xf32>
    %c3_183 = arith.constant 3 : index
    %c2_184 = arith.constant 2 : index
    %c0_185 = arith.constant 0 : index
    %160 = vector.load %arg13[%c3_183, %c2_184, %c0_185] : memref<10x10x16xf32, #tpu.memory_space<vmem>>, vector<1x8x16xf32>
    %161 = vector.shape_cast %160 : vector<1x8x16xf32> to vector<8x16xf32>
    %c4_186 = arith.constant 4 : index
    %c2_187 = arith.constant 2 : index
    %c0_188 = arith.constant 0 : index
    %162 = vector.load %arg13[%c4_186, %c2_187, %c0_188] : memref<10x10x16xf32, #tpu.memory_space<vmem>>, vector<1x8x16xf32>
    %163 = vector.shape_cast %162 : vector<1x8x16xf32> to vector<8x16xf32>
    %c5_189 = arith.constant 5 : index
    %c2_190 = arith.constant 2 : index
    %c0_191 = arith.constant 0 : index
    %164 = vector.load %arg13[%c5_189, %c2_190, %c0_191] : memref<10x10x16xf32, #tpu.memory_space<vmem>>, vector<1x8x16xf32>
    %165 = vector.shape_cast %164 : vector<1x8x16xf32> to vector<8x16xf32>
    %166 = tpu.concatenate %149, %151, %153, %155, %157, %159, %161, %163, %165 in 1 : vector<8x16xf32>, vector<8x16xf32>, vector<8x16xf32>, vector<8x16xf32>, vector<8x16xf32>, vector<8x16xf32>, vector<8x16xf32>, vector<8x16xf32>, vector<8x16xf32> -> vector<8x144xf32>
    %c5_192 = arith.constant 5 : index
    %c0_193 = arith.constant 0 : index
    %c0_194 = arith.constant 0 : index
    %167 = vector.load %arg13[%c5_192, %c0_193, %c0_194] : memref<10x10x16xf32, #tpu.memory_space<vmem>>, vector<1x8x16xf32>
    %168 = vector.shape_cast %167 : vector<1x8x16xf32> to vector<8x16xf32>
    %c6_195 = arith.constant 6 : index
    %c0_196 = arith.constant 0 : index
    %c0_197 = arith.constant 0 : index
    %169 = vector.load %arg13[%c6_195, %c0_196, %c0_197] : memref<10x10x16xf32, #tpu.memory_space<vmem>>, vector<1x8x16xf32>
    %170 = vector.shape_cast %169 : vector<1x8x16xf32> to vector<8x16xf32>
    %c7_198 = arith.constant 7 : index
    %c0_199 = arith.constant 0 : index
    %c0_200 = arith.constant 0 : index
    %171 = vector.load %arg13[%c7_198, %c0_199, %c0_200] : memref<10x10x16xf32, #tpu.memory_space<vmem>>, vector<1x8x16xf32>
    %172 = vector.shape_cast %171 : vector<1x8x16xf32> to vector<8x16xf32>
    %c5_201 = arith.constant 5 : index
    %c1_202 = arith.constant 1 : index
    %c0_203 = arith.constant 0 : index
    %173 = vector.load %arg13[%c5_201, %c1_202, %c0_203] : memref<10x10x16xf32, #tpu.memory_space<vmem>>, vector<1x8x16xf32>
    %174 = vector.shape_cast %173 : vector<1x8x16xf32> to vector<8x16xf32>
    %c6_204 = arith.constant 6 : index
    %c1_205 = arith.constant 1 : index
    %c0_206 = arith.constant 0 : index
    %175 = vector.load %arg13[%c6_204, %c1_205, %c0_206] : memref<10x10x16xf32, #tpu.memory_space<vmem>>, vector<1x8x16xf32>
    %176 = vector.shape_cast %175 : vector<1x8x16xf32> to vector<8x16xf32>
    %c7_207 = arith.constant 7 : index
    %c1_208 = arith.constant 1 : index
    %c0_209 = arith.constant 0 : index
    %177 = vector.load %arg13[%c7_207, %c1_208, %c0_209] : memref<10x10x16xf32, #tpu.memory_space<vmem>>, vector<1x8x16xf32>
    %178 = vector.shape_cast %177 : vector<1x8x16xf32> to vector<8x16xf32>
    %c5_210 = arith.constant 5 : index
    %c2_211 = arith.constant 2 : index
    %c0_212 = arith.constant 0 : index
    %179 = vector.load %arg13[%c5_210, %c2_211, %c0_212] : memref<10x10x16xf32, #tpu.memory_space<vmem>>, vector<1x8x16xf32>
    %180 = vector.shape_cast %179 : vector<1x8x16xf32> to vector<8x16xf32>
    %c6_213 = arith.constant 6 : index
    %c2_214 = arith.constant 2 : index
    %c0_215 = arith.constant 0 : index
    %181 = vector.load %arg13[%c6_213, %c2_214, %c0_215] : memref<10x10x16xf32, #tpu.memory_space<vmem>>, vector<1x8x16xf32>
    %182 = vector.shape_cast %181 : vector<1x8x16xf32> to vector<8x16xf32>
    %c7_216 = arith.constant 7 : index
    %c2_217 = arith.constant 2 : index
    %c0_218 = arith.constant 0 : index
    %183 = vector.load %arg13[%c7_216, %c2_217, %c0_218] : memref<10x10x16xf32, #tpu.memory_space<vmem>>, vector<1x8x16xf32>
    %184 = vector.shape_cast %183 : vector<1x8x16xf32> to vector<8x16xf32>
    %185 = tpu.concatenate %168, %170, %172, %174, %176, %178, %180, %182, %184 in 1 : vector<8x16xf32>, vector<8x16xf32>, vector<8x16xf32>, vector<8x16xf32>, vector<8x16xf32>, vector<8x16xf32>, vector<8x16xf32>, vector<8x16xf32>, vector<8x16xf32> -> vector<8x144xf32>
    %c7_219 = arith.constant 7 : index
    %c0_220 = arith.constant 0 : index
    %c0_221 = arith.constant 0 : index
    %186 = vector.load %arg13[%c7_219, %c0_220, %c0_221] : memref<10x10x16xf32, #tpu.memory_space<vmem>>, vector<1x8x16xf32>
    %187 = vector.shape_cast %186 : vector<1x8x16xf32> to vector<8x16xf32>
    %c8_222 = arith.constant 8 : index
    %c0_223 = arith.constant 0 : index
    %c0_224 = arith.constant 0 : index
    %188 = vector.load %arg13[%c8_222, %c0_223, %c0_224] : memref<10x10x16xf32, #tpu.memory_space<vmem>>, vector<1x8x16xf32>
    %189 = vector.shape_cast %188 : vector<1x8x16xf32> to vector<8x16xf32>
    %c9 = arith.constant 9 : index
    %c0_225 = arith.constant 0 : index
    %c0_226 = arith.constant 0 : index
    %190 = vector.load %arg13[%c9, %c0_225, %c0_226] : memref<10x10x16xf32, #tpu.memory_space<vmem>>, vector<1x8x16xf32>
    %191 = vector.shape_cast %190 : vector<1x8x16xf32> to vector<8x16xf32>
    %c7_227 = arith.constant 7 : index
    %c1_228 = arith.constant 1 : index
    %c0_229 = arith.constant 0 : index
    %192 = vector.load %arg13[%c7_227, %c1_228, %c0_229] : memref<10x10x16xf32, #tpu.memory_space<vmem>>, vector<1x8x16xf32>
    %193 = vector.shape_cast %192 : vector<1x8x16xf32> to vector<8x16xf32>
    %c8_230 = arith.constant 8 : index
    %c1_231 = arith.constant 1 : index
    %c0_232 = arith.constant 0 : index
    %194 = vector.load %arg13[%c8_230, %c1_231, %c0_232] : memref<10x10x16xf32, #tpu.memory_space<vmem>>, vector<1x8x16xf32>
    %195 = vector.shape_cast %194 : vector<1x8x16xf32> to vector<8x16xf32>
    %c9_233 = arith.constant 9 : index
    %c1_234 = arith.constant 1 : index
    %c0_235 = arith.constant 0 : index
    %196 = vector.load %arg13[%c9_233, %c1_234, %c0_235] : memref<10x10x16xf32, #tpu.memory_space<vmem>>, vector<1x8x16xf32>
    %197 = vector.shape_cast %196 : vector<1x8x16xf32> to vector<8x16xf32>
    %c7_236 = arith.constant 7 : index
    %c2_237 = arith.constant 2 : index
    %c0_238 = arith.constant 0 : index
    %198 = vector.load %arg13[%c7_236, %c2_237, %c0_238] : memref<10x10x16xf32, #tpu.memory_space<vmem>>, vector<1x8x16xf32>
    %199 = vector.shape_cast %198 : vector<1x8x16xf32> to vector<8x16xf32>
    %c8_239 = arith.constant 8 : index
    %c2_240 = arith.constant 2 : index
    %c0_241 = arith.constant 0 : index
    %200 = vector.load %arg13[%c8_239, %c2_240, %c0_241] : memref<10x10x16xf32, #tpu.memory_space<vmem>>, vector<1x8x16xf32>
    %201 = vector.shape_cast %200 : vector<1x8x16xf32> to vector<8x16xf32>
    %c9_242 = arith.constant 9 : index
    %c2_243 = arith.constant 2 : index
    %c0_244 = arith.constant 0 : index
    %202 = vector.load %arg13[%c9_242, %c2_243, %c0_244] : memref<10x10x16xf32, #tpu.memory_space<vmem>>, vector<1x8x16xf32>
    %203 = vector.shape_cast %202 : vector<1x8x16xf32> to vector<8x16xf32>
    %204 = tpu.concatenate %187, %189, %191, %193, %195, %197, %199, %201, %203 in 1 : vector<8x16xf32>, vector<8x16xf32>, vector<8x16xf32>, vector<8x16xf32>, vector<8x16xf32>, vector<8x16xf32>, vector<8x16xf32>, vector<8x16xf32>, vector<8x16xf32> -> vector<8x144xf32>
    %205 = tpu.concatenate %147, %166, %185, %204 in 0 : vector<8x144xf32>, vector<8x144xf32>, vector<8x144xf32>, vector<8x144xf32> -> vector<32x144xf32>
    %cst_245 = arith.constant dense<0.000000e+00> : vector<32x32xf32>
    %206 = tpu.matmul %205, %50, %cst_245 {dimension_numbers = #tpu.dot_dimension_numbers<[1], [0], [0], [1], [0, 0, 1, 1], [], []>} : vector<32x144xf32>, vector<144x32xf32>, vector<32x32xf32> -> vector<32x32xf32>
    %207 = arith.maximumf %128, %206 : vector<32x32xf32>
    %c0_246 = arith.constant 0 : index
    %c0_247 = arith.constant 0 : index
    %208 = vector.load %arg5[%c0_246, %c0_247] : memref<1x32xf32, #tpu.memory_space<vmem>>, vector<1x32xf32>
    %209 = vector.broadcast %208 : vector<1x32xf32> to vector<32x32xf32>
    %210 = arith.addf %207, %209 : vector<32x32xf32>
    %cst_248 = arith.constant 0.000000e+00 : f32
    %211 = vector.broadcast %cst_248 : f32 to vector<32x32xf32>
    %212 = arith.maximumf %210, %211 : vector<32x32xf32>
    %213 = vector.extract_strided_slice %212 {offsets = [0, 0], sizes = [1, 32], strides = [1, 1]} : vector<32x32xf32> to vector<1x32xf32>
    %214 = vector.extract_strided_slice %212 {offsets = [1, 0], sizes = [1, 32], strides = [1, 1]} : vector<32x32xf32> to vector<1x32xf32>
    %215 = arith.maximumf %213, %214 : vector<1x32xf32>
    %216 = vector.extract_strided_slice %212 {offsets = [2, 0], sizes = [1, 32], strides = [1, 1]} : vector<32x32xf32> to vector<1x32xf32>
    %217 = vector.extract_strided_slice %212 {offsets = [3, 0], sizes = [1, 32], strides = [1, 1]} : vector<32x32xf32> to vector<1x32xf32>
    %218 = arith.maximumf %216, %217 : vector<1x32xf32>
    %219 = vector.extract_strided_slice %212 {offsets = [4, 0], sizes = [1, 32], strides = [1, 1]} : vector<32x32xf32> to vector<1x32xf32>
    %220 = vector.extract_strided_slice %212 {offsets = [5, 0], sizes = [1, 32], strides = [1, 1]} : vector<32x32xf32> to vector<1x32xf32>
    %221 = arith.maximumf %219, %220 : vector<1x32xf32>
    %222 = vector.extract_strided_slice %212 {offsets = [6, 0], sizes = [1, 32], strides = [1, 1]} : vector<32x32xf32> to vector<1x32xf32>
    %223 = vector.extract_strided_slice %212 {offsets = [7, 0], sizes = [1, 32], strides = [1, 1]} : vector<32x32xf32> to vector<1x32xf32>
    %224 = arith.maximumf %222, %223 : vector<1x32xf32>
    %225 = vector.extract_strided_slice %212 {offsets = [8, 0], sizes = [1, 32], strides = [1, 1]} : vector<32x32xf32> to vector<1x32xf32>
    %226 = vector.extract_strided_slice %212 {offsets = [9, 0], sizes = [1, 32], strides = [1, 1]} : vector<32x32xf32> to vector<1x32xf32>
    %227 = arith.maximumf %225, %226 : vector<1x32xf32>
    %228 = vector.extract_strided_slice %212 {offsets = [10, 0], sizes = [1, 32], strides = [1, 1]} : vector<32x32xf32> to vector<1x32xf32>
    %229 = vector.extract_strided_slice %212 {offsets = [11, 0], sizes = [1, 32], strides = [1, 1]} : vector<32x32xf32> to vector<1x32xf32>
    %230 = arith.maximumf %228, %229 : vector<1x32xf32>
    %231 = vector.extract_strided_slice %212 {offsets = [12, 0], sizes = [1, 32], strides = [1, 1]} : vector<32x32xf32> to vector<1x32xf32>
    %232 = vector.extract_strided_slice %212 {offsets = [13, 0], sizes = [1, 32], strides = [1, 1]} : vector<32x32xf32> to vector<1x32xf32>
    %233 = arith.maximumf %231, %232 : vector<1x32xf32>
    %234 = vector.extract_strided_slice %212 {offsets = [14, 0], sizes = [1, 32], strides = [1, 1]} : vector<32x32xf32> to vector<1x32xf32>
    %235 = vector.extract_strided_slice %212 {offsets = [15, 0], sizes = [1, 32], strides = [1, 1]} : vector<32x32xf32> to vector<1x32xf32>
    %236 = arith.maximumf %234, %235 : vector<1x32xf32>
    %237 = vector.extract_strided_slice %212 {offsets = [16, 0], sizes = [1, 32], strides = [1, 1]} : vector<32x32xf32> to vector<1x32xf32>
    %238 = vector.extract_strided_slice %212 {offsets = [17, 0], sizes = [1, 32], strides = [1, 1]} : vector<32x32xf32> to vector<1x32xf32>
    %239 = arith.maximumf %237, %238 : vector<1x32xf32>
    %240 = vector.extract_strided_slice %212 {offsets = [18, 0], sizes = [1, 32], strides = [1, 1]} : vector<32x32xf32> to vector<1x32xf32>
    %241 = vector.extract_strided_slice %212 {offsets = [19, 0], sizes = [1, 32], strides = [1, 1]} : vector<32x32xf32> to vector<1x32xf32>
    %242 = arith.maximumf %240, %241 : vector<1x32xf32>
    %243 = vector.extract_strided_slice %212 {offsets = [20, 0], sizes = [1, 32], strides = [1, 1]} : vector<32x32xf32> to vector<1x32xf32>
    %244 = vector.extract_strided_slice %212 {offsets = [21, 0], sizes = [1, 32], strides = [1, 1]} : vector<32x32xf32> to vector<1x32xf32>
    %245 = arith.maximumf %243, %244 : vector<1x32xf32>
    %246 = vector.extract_strided_slice %212 {offsets = [22, 0], sizes = [1, 32], strides = [1, 1]} : vector<32x32xf32> to vector<1x32xf32>
    %247 = vector.extract_strided_slice %212 {offsets = [23, 0], sizes = [1, 32], strides = [1, 1]} : vector<32x32xf32> to vector<1x32xf32>
    %248 = arith.maximumf %246, %247 : vector<1x32xf32>
    %249 = vector.extract_strided_slice %212 {offsets = [24, 0], sizes = [1, 32], strides = [1, 1]} : vector<32x32xf32> to vector<1x32xf32>
    %250 = vector.extract_strided_slice %212 {offsets = [25, 0], sizes = [1, 32], strides = [1, 1]} : vector<32x32xf32> to vector<1x32xf32>
    %251 = arith.maximumf %249, %250 : vector<1x32xf32>
    %252 = vector.extract_strided_slice %212 {offsets = [26, 0], sizes = [1, 32], strides = [1, 1]} : vector<32x32xf32> to vector<1x32xf32>
    %253 = vector.extract_strided_slice %212 {offsets = [27, 0], sizes = [1, 32], strides = [1, 1]} : vector<32x32xf32> to vector<1x32xf32>
    %254 = arith.maximumf %252, %253 : vector<1x32xf32>
    %255 = vector.extract_strided_slice %212 {offsets = [28, 0], sizes = [1, 32], strides = [1, 1]} : vector<32x32xf32> to vector<1x32xf32>
    %256 = vector.extract_strided_slice %212 {offsets = [29, 0], sizes = [1, 32], strides = [1, 1]} : vector<32x32xf32> to vector<1x32xf32>
    %257 = arith.maximumf %255, %256 : vector<1x32xf32>
    %258 = vector.extract_strided_slice %212 {offsets = [30, 0], sizes = [1, 32], strides = [1, 1]} : vector<32x32xf32> to vector<1x32xf32>
    %259 = vector.extract_strided_slice %212 {offsets = [31, 0], sizes = [1, 32], strides = [1, 1]} : vector<32x32xf32> to vector<1x32xf32>
    %260 = arith.maximumf %258, %259 : vector<1x32xf32>
    %261 = tpu.concatenate %215, %218, %221, %224, %227, %230, %233, %236, %239, %242, %245, %248, %251, %254, %257, %260 in 1 : vector<1x32xf32>, vector<1x32xf32>, vector<1x32xf32>, vector<1x32xf32>, vector<1x32xf32>, vector<1x32xf32>, vector<1x32xf32>, vector<1x32xf32>, vector<1x32xf32>, vector<1x32xf32>, vector<1x32xf32>, vector<1x32xf32>, vector<1x32xf32>, vector<1x32xf32>, vector<1x32xf32>, vector<1x32xf32> -> vector<1x512xf32>
    %c0_249 = arith.constant 0 : index
    %c0_250 = arith.constant 0 : index
    %262 = vector.load %arg6[%c0_249, %c0_250] : memref<512x64xf32, #tpu.memory_space<vmem>>, vector<512x64xf32>
    %cst_251 = arith.constant dense<0.000000e+00> : vector<1x64xf32>
    %263 = tpu.matmul %261, %262, %cst_251 {dimension_numbers = #tpu.dot_dimension_numbers<[1], [0], [0], [1], [0, 0, 1, 1], [], []>} : vector<1x512xf32>, vector<512x64xf32>, vector<1x64xf32> -> vector<1x64xf32>
    %c0_252 = arith.constant 0 : index
    %c0_253 = arith.constant 0 : index
    %264 = vector.load %arg7[%c0_252, %c0_253] : memref<1x64xf32, #tpu.memory_space<vmem>>, vector<1x64xf32>
    %265 = arith.addf %263, %264 : vector<1x64xf32>
    %cst_254 = arith.constant 0.000000e+00 : f32
    %266 = vector.broadcast %cst_254 : f32 to vector<1x64xf32>
    %267 = arith.maximumf %265, %266 : vector<1x64xf32>
    %c0_255 = arith.constant 0 : index
    %c0_256 = arith.constant 0 : index
    %268 = vector.load %arg8[%c0_255, %c0_256] : memref<64x32xf32, #tpu.memory_space<vmem>>, vector<64x32xf32>
    %cst_257 = arith.constant dense<0.000000e+00> : vector<1x32xf32>
    %269 = tpu.matmul %267, %268, %cst_257 {dimension_numbers = #tpu.dot_dimension_numbers<[1], [0], [0], [1], [0, 0, 1, 1], [], []>} : vector<1x64xf32>, vector<64x32xf32>, vector<1x32xf32> -> vector<1x32xf32>
    %c0_258 = arith.constant 0 : index
    %c0_259 = arith.constant 0 : index
    %270 = vector.load %arg9[%c0_258, %c0_259] : memref<1x32xf32, #tpu.memory_space<vmem>>, vector<1x32xf32>
    %271 = arith.addf %269, %270 : vector<1x32xf32>
    %cst_260 = arith.constant 0.000000e+00 : f32
    %272 = vector.broadcast %cst_260 : f32 to vector<1x32xf32>
    %273 = arith.maximumf %271, %272 : vector<1x32xf32>
    %c0_261 = arith.constant 0 : index
    %c0_262 = arith.constant 0 : index
    %274 = vector.load %arg10[%c0_261, %c0_262] : memref<32x10xf32, #tpu.memory_space<vmem>>, vector<32x10xf32>
    %cst_263 = arith.constant dense<0.000000e+00> : vector<1x10xf32>
    %275 = tpu.matmul %273, %274, %cst_263 {dimension_numbers = #tpu.dot_dimension_numbers<[1], [0], [0], [1], [0, 0, 1, 1], [], []>} : vector<1x32xf32>, vector<32x10xf32>, vector<1x10xf32> -> vector<1x10xf32>
    %c0_264 = arith.constant 0 : index
    %c0_265 = arith.constant 0 : index
    %276 = vector.load %arg11[%c0_264, %c0_265] : memref<1x10xf32, #tpu.memory_space<vmem>>, vector<1x10xf32>
    %277 = arith.addf %275, %276 : vector<1x10xf32>
    %c0_266 = arith.constant 0 : index
    %c0_267 = arith.constant 0 : index
    %c0_268 = arith.constant 0 : index
    %278 = vector.load %arg12[%c0_266, %c0_267, %c0_268] : memref<1x1x10xf32, #tpu.memory_space<vmem>>, vector<1x1x10xf32>
    %279 = vector.shape_cast %278 : vector<1x1x10xf32> to vector<1x10xf32>
    %280 = vector.shape_cast %277 : vector<1x10xf32> to vector<1x1x10xf32>
    tpu.vector_store %arg12[%c0_266, %c0_267, %c0_268], %280 {strides = array<i32>} : memref<1x1x10xf32, #tpu.memory_space<vmem>>, vector<1x1x10xf32>,
    return
  }
  func.func @transform_0(%arg0: i32) -> (i32, i32, i32) {
    %c0_i32 = arith.constant 0 : i32
    %c0_i32_0 = arith.constant 0 : i32
    %c0_i32_1 = arith.constant 0 : i32
    return %arg0, %c0_i32, %c0_i32_0 : i32, i32, i32
  }
  func.func @transform_1(%arg0: i32) -> (i32, i32) {
    %c0_i32 = arith.constant 0 : i32
    %c0_i32_0 = arith.constant 0 : i32
    %c0_i32_1 = arith.constant 0 : i32
    return %c0_i32, %c0_i32_0 : i32, i32
  }
  func.func @transform_2(%arg0: i32) -> (i32, i32) {
    %c0_i32 = arith.constant 0 : i32
    %c0_i32_0 = arith.constant 0 : i32
    %c0_i32_1 = arith.constant 0 : i32
    return %c0_i32, %c0_i32_0 : i32, i32
  }
  func.func @transform_3(%arg0: i32) -> (i32, i32) {
    %c0_i32 = arith.constant 0 : i32
    %c0_i32_0 = arith.constant 0 : i32
    %c0_i32_1 = arith.constant 0 : i32
    return %c0_i32, %c0_i32_0 : i32, i32
  }
  func.func @transform_4(%arg0: i32) -> (i32, i32) {
    %c0_i32 = arith.constant 0 : i32
    %c0_i32_0 = arith.constant 0 : i32
    %c0_i32_1 = arith.constant 0 : i32
    return %c0_i32, %c0_i32_0 : i32, i32
  }
  func.func @transform_5(%arg0: i32) -> (i32, i32) {
    %c0_i32 = arith.constant 0 : i32
    %c0_i32_0 = arith.constant 0 : i32
    %c0_i32_1 = arith.constant 0 : i32
    return %c0_i32, %c0_i32_0 : i32, i32
  }
  func.func @transform_6(%arg0: i32) -> (i32, i32) {
    %c0_i32 = arith.constant 0 : i32
    %c0_i32_0 = arith.constant 0 : i32
    %c0_i32_1 = arith.constant 0 : i32
    return %c0_i32, %c0_i32_0 : i32, i32
  }
  func.func @transform_7(%arg0: i32) -> (i32, i32) {
    %c0_i32 = arith.constant 0 : i32
    %c0_i32_0 = arith.constant 0 : i32
    %c0_i32_1 = arith.constant 0 : i32
    return %c0_i32, %c0_i32_0 : i32, i32
  }
  func.func @transform_8(%arg0: i32) -> (i32, i32) {
    %c0_i32 = arith.constant 0 : i32
    %c0_i32_0 = arith.constant 0 : i32
    %c0_i32_1 = arith.constant 0 : i32
    return %c0_i32, %c0_i32_0 : i32, i32
  }
  func.func @transform_9(%arg0: i32) -> (i32, i32) {
    %c0_i32 = arith.constant 0 : i32
    %c0_i32_0 = arith.constant 0 : i32
    %c0_i32_1 = arith.constant 0 : i32
    return %c0_i32, %c0_i32_0 : i32, i32
  }
  func.func @transform_10(%arg0: i32) -> (i32, i32) {
    %c0_i32 = arith.constant 0 : i32
    %c0_i32_0 = arith.constant 0 : i32
    %c0_i32_1 = arith.constant 0 : i32
    return %c0_i32, %c0_i32_0 : i32, i32
  }
  func.func @transform_11(%arg0: i32) -> (i32, i32, i32) {
    %c0_i32 = arith.constant 0 : i32
    %c0_i32_0 = arith.constant 0 : i32
    %c0_i32_1 = arith.constant 0 : i32
    return %arg0, %c0_i32, %c0_i32_0 : i32, i32, i32
  }
}

</mosaic_0001>

<llo_original>
// kernel: fused_forward.1
$region0: #{fused_forward.1}
  #allocation0 [shape = 'u32[]', space=smem, size = 0x4, offset = 0x4, fixed_abs, tag = 'smem constant byte address 0x4 - core index']
  #allocation1 [shape = 'u32[144,128]{1,0:T(1,128)}', space=vmem, size = 0x12000, scoped, tag = 'internal scratch']
  #allocation2 [shape = 'f32[10,10,16]{2,1,0:T(8,128)}', space=vmem, size = 0x14000, scoped, tag = 'scratch operand']
  %s0 = inlined_call_operand.vmem [shape: f32[2,256,9], index: 0, kind: input, shape index: {}]
  %s1 = inlined_call_operand.vmem [shape: f32[9,16], index: 1, kind: input, shape index: {}]
  %s2 = inlined_call_operand.vmem [shape: f32[1,16], index: 2, kind: input, shape index: {}]
  %s3 = inlined_call_operand.vmem [shape: f32[144,32], index: 3, kind: input, shape index: {}]
  %s4 = inlined_call_operand.vmem [shape: f32[1,32], index: 4, kind: input, shape index: {}]
  %s5 = inlined_call_operand.vmem [shape: f32[512,64], index: 5, kind: input, shape index: {}]
  %s6 = inlined_call_operand.vmem [shape: f32[1,64], index: 6, kind: input, shape index: {}]
  %s7 = inlined_call_operand.vmem [shape: f32[64,32], index: 7, kind: input, shape index: {}]
  %s8 = inlined_call_operand.vmem [shape: f32[1,32], index: 8, kind: input, shape index: {}]
  %s9 = inlined_call_operand.vmem [shape: f32[32,10], index: 9, kind: input, shape index: {}]
  %s10 = inlined_call_operand.vmem [shape: f32[1,10], index: 10, kind: input, shape index: {}]
  %s11 = inlined_call_operand.hbm [shape: f32[2,1,10], index: 11, kind: output, shape index: {}]
  %s12 = sld [smem:[#allocation0]]
  $region77: #{fused_forward.1} parent=0
    _
  %s14 = ssub.s32 1, %s12
  %s15 = scalar_select 0, %s14, %s12
  $region1: #{fused_forward.1} parent=0
    #allocation3 [shape = 'u8[1024]{0}', space=vmem, size = 0x400, scoped, tag = 'output window, operand 0']
    #allocation4 [shape = 's32[2]{0}', space=sflag, size = 0x8, scoped, tag = 'scoped memory for fused_forward.1']
    %16 = vsyncpa [#allocation4], 0
    %s17 = scalar_lea.sflag [#allocation4], 1
    %18 = vsyncpa %s17, 0
    loop: start=0, step=1, limit=4
    $region2: #{fused_forward.1} parent=1 // loop_pre_header
      _
    $region3: #{fused_forward.1} parent=1 // loop_header
      %s20 = sphi 0, %s24
      %p21 = scmp.ge.s32.totalorder %s20, 4
      %s30 = sphi 0, %s32
      %s33 = sphi 0, %s30
      %s34 = sphi 0, %s33
      %s50 = sphi 0, %s34
      %s54 = sphi 0, %s54
      %s56 = sphi 0, %s54
      %s57 = sphi 0, %s56
      %s71 = sphi 0, %s57
      %s75 = sphi 0, %s75
      %s77 = sphi 0, %s75
      %s78 = sphi 0, %s77
      %s92 = sphi 0, %s78
      %s96 = sphi 0, %s96
      %s98 = sphi 0, %s96
      %s99 = sphi 0, %s98
      %s113 = sphi 0, %s99
      %s117 = sphi 0, %s117
      %s119 = sphi 0, %s117
      %s120 = sphi 0, %s119
      %s134 = sphi 0, %s120
      %s138 = sphi 0, %s138
      %s140 = sphi 0, %s138
      %s141 = sphi 0, %s140
      %s155 = sphi 0, %s141
      %s159 = sphi 0, %s159
      %s161 = sphi 0, %s159
      %s162 = sphi 0, %s161
      %s176 = sphi 0, %s162
      %s180 = sphi 0, %s180
      %s182 = sphi 0, %s180
      %s183 = sphi 0, %s182
      %s197 = sphi 0, %s183
      %s201 = sphi 0, %s201
      %s203 = sphi 0, %s201
      %s204 = sphi 0, %s203
      %s218 = sphi 0, %s204
      %s222 = sphi 0, %s222
      %s224 = sphi 0, %s222
      %s225 = sphi 0, %s224
      %s239 = sphi 0, %s225
      %s243 = sphi 0, %s243
      %s245 = sphi 0, %s243
      %s246 = sphi 0, %s245
      %s260 = sphi 0, %s246
      %s266 = sphi 0, %s268
      %s269 = sphi 0, %s266
      %s270 = sphi 0, %s269
      %s286 = sphi 0, %s270
    $region4: #{fused_forward.1} parent=1 // loop_header_branch
      %23 = sbr.rel (%p21) target = $region8
    $region5: #{fused_forward.1} parent=1 // loop_body
      %s25 = ssub.s32 %s20, 1
      %s26 = ssub.s32 %s20, 2
      %s27 = sadd.s32 %s20, 1
      %s28 = ssub.s32 %s20, %s27
      %p29 = scmp.eq.s32.totalorder %s28, 0
      %s31 = sadd.s32 %s30, 1
      %s32 = scalar_select %p29, %s30, %s31
      %p35 = pneg %p29
      %p36 = scmp.eq.s32.totalorder %s20, 1
      %p37 = por %p35, %p36
      %p38 = scmp.ne.s32.totalorder %s30, %s33
      %p39 = scmp.eq.s32.totalorder %s20, 0
      %p40 = por %p38, %p39
      %p41 = scmp.ne.s32.totalorder %s30, %s33
      %p42 = scmp.eq.s32.totalorder %s25, 1
      %p43 = por %p41, %p42
      %p44 = scmp.ne.s32.totalorder %s33, %s34
      %p45 = scmp.eq.s32.totalorder %s25, 0
      %p46 = por %p44, %p45
      %p47 = scmp.ne.s32.totalorder %s33, %s34
      %p48 = scmp.eq.s32.totalorder %s26, 1
      %p49 = por %p47, %p48
      %p51 = scmp.ne.s32.totalorder %s34, %s50
      %p52 = scmp.eq.s32.totalorder %s26, 0
      %p53 = por %p51, %p52
      %s55 = sadd.s32 %s54, 1
      %p58 = scmp.eq.s32.totalorder %s20, 1
      %p59 = scmp.ne.s32.totalorder %s54, %s56
      %p60 = scmp.eq.s32.totalorder %s20, 0
      %p61 = por %p59, %p60
      %p62 = scmp.ne.s32.totalorder %s54, %s56
      %p63 = scmp.eq.s32.totalorder %s25, 1
      %p64 = por %p62, %p63
      %p65 = scmp.ne.s32.totalorder %s56, %s57
      %p66 = scmp.eq.s32.totalorder %s25, 0
      %p67 = por %p65, %p66
      %p68 = scmp.ne.s32.totalorder %s56, %s57
      %p69 = scmp.eq.s32.totalorder %s26, 1
      %p70 = por %p68, %p69
      %p72 = scmp.ne.s32.totalorder %s57, %s71
      %p73 = scmp.eq.s32.totalorder %s26, 0
      %p74 = por %p72, %p73
      %s76 = sadd.s32 %s75, 1
      %p79 = scmp.eq.s32.totalorder %s20, 1
      %p80 = scmp.ne.s32.totalorder %s75, %s77
      %p81 = scmp.eq.s32.totalorder %s20, 0
      %p82 = por %p80, %p81
      %p83 = scmp.ne.s32.totalorder %s75, %s77
      %p84 = scmp.eq.s32.totalorder %s25, 1
      %p85 = por %p83, %p84
      %p86 = scmp.ne.s32.totalorder %s77, %s78
      %p87 = scmp.eq.s32.totalorder %s25, 0
      %p88 = por %p86, %p87
      %p89 = scmp.ne.s32.totalorder %s77, %s78
      %p90 = scmp.eq.s32.totalorder %s26, 1
      %p91 = por %p89, %p90
      %p93 = scmp.ne.s32.totalorder %s78, %s92
      %p94 = scmp.eq.s32.totalorder %s26, 0
      %p95 = por %p93, %p94
      %s97 = sadd.s32 %s96, 1
      %p100 = scmp.eq.s32.totalorder %s20, 1
      %p101 = scmp.ne.s32.totalorder %s96, %s98
      %p102 = scmp.eq.s32.totalorder %s20, 0
      %p103 = por %p101, %p102
      %p104 = scmp.ne.s32.totalorder %s96, %s98
      %p105 = scmp.eq.s32.totalorder %s25, 1
      %p106 = por %p104, %p105
      %p107 = scmp.ne.s32.totalorder %s98, %s99
      %p108 = scmp.eq.s32.totalorder %s25, 0
      %p109 = por %p107, %p108
      %p110 = scmp.ne.s32.totalorder %s98, %s99
      %p111 = scmp.eq.s32.totalorder %s26, 1
      %p112 = por %p110, %p111
      %p114 = scmp.ne.s32.totalorder %s99, %s113
      %p115 = scmp.eq.s32.totalorder %s26, 0
      %p116 = por %p114, %p115
      %s118 = sadd.s32 %s117, 1
      %p121 = scmp.eq.s32.totalorder %s20, 1
      %p122 = scmp.ne.s32.totalorder %s117, %s119
      %p123 = scmp.eq.s32.totalorder %s20, 0
      %p124 = por %p122, %p123
      %p125 = scmp.ne.s32.totalorder %s117, %s119
      %p126 = scmp.eq.s32.totalorder %s25, 1
      %p127 = por %p125, %p126
      %p128 = scmp.ne.s32.totalorder %s119, %s120
      %p129 = scmp.eq.s32.totalorder %s25, 0
      %p130 = por %p128, %p129
      %p131 = scmp.ne.s32.totalorder %s119, %s120
      %p132 = scmp.eq.s32.totalorder %s26, 1
      %p133 = por %p131, %p132
      %p135 = scmp.ne.s32.totalorder %s120, %s134
      %p136 = scmp.eq.s32.totalorder %s26, 0
      %p137 = por %p135, %p136
      %s139 = sadd.s32 %s138, 1
      %p142 = scmp.eq.s32.totalorder %s20, 1
      %p143 = scmp.ne.s32.totalorder %s138, %s140
      %p144 = scmp.eq.s32.totalorder %s20, 0
      %p145 = por %p143, %p144
      %p146 = scmp.ne.s32.totalorder %s138, %s140
      %p147 = scmp.eq.s32.totalorder %s25, 1
      %p148 = por %p146, %p147
      %p149 = scmp.ne.s32.totalorder %s140, %s141
      %p150 = scmp.eq.s32.totalorder %s25, 0
      %p151 = por %p149, %p150
      %p152 = scmp.ne.s32.totalorder %s140, %s141
      %p153 = scmp.eq.s32.totalorder %s26, 1
      %p154 = por %p152, %p153
      %p156 = scmp.ne.s32.totalorder %s141, %s155
      %p157 = scmp.eq.s32.totalorder %s26, 0
      %p158 = por %p156, %p157
      %s160 = sadd.s32 %s159, 1
      %p163 = scmp.eq.s32.totalorder %s20, 1
      %p164 = scmp.ne.s32.totalorder %s159, %s161
      %p165 = scmp.eq.s32.totalorder %s20, 0
      %p166 = por %p164, %p165
      %p167 = scmp.ne.s32.totalorder %s159, %s161
      %p168 = scmp.eq.s32.totalorder %s25, 1
      %p169 = por %p167, %p168
      %p170 = scmp.ne.s32.totalorder %s161, %s162
      %p171 = scmp.eq.s32.totalorder %s25, 0
      %p172 = por %p170, %p171
      %p173 = scmp.ne.s32.totalorder %s161, %s162
      %p174 = scmp.eq.s32.totalorder %s26, 1
      %p175 = por %p173, %p174
      %p177 = scmp.ne.s32.totalorder %s162, %s176
      %p178 = scmp.eq.s32.totalorder %s26, 0
      %p179 = por %p177, %p178
      %s181 = sadd.s32 %s180, 1
      %p184 = scmp.eq.s32.totalorder %s20, 1
      %p185 = scmp.ne.s32.totalorder %s180, %s182
      %p186 = scmp.eq.s32.totalorder %s20, 0
      %p187 = por %p185, %p186
      %p188 = scmp.ne.s32.totalorder %s180, %s182
      %p189 = scmp.eq.s32.totalorder %s25, 1
      %p190 = por %p188, %p189
      %p191 = scmp.ne.s32.totalorder %s182, %s183
      %p192 = scmp.eq.s32.totalorder %s25, 0
      %p193 = por %p191, %p192
      %p194 = scmp.ne.s32.totalorder %s182, %s183
      %p195 = scmp.eq.s32.totalorder %s26, 1
      %p196 = por %p194, %p195
      %p198 = scmp.ne.s32.totalorder %s183, %s197
      %p199 = scmp.eq.s32.totalorder %s26, 0
      %p200 = por %p198, %p199
      %s202 = sadd.s32 %s201, 1
      %p205 = scmp.eq.s32.totalorder %s20, 1
      %p206 = scmp.ne.s32.totalorder %s201, %s203
      %p207 = scmp.eq.s32.totalorder %s20, 0
      %p208 = por %p206, %p207
      %p209 = scmp.ne.s32.totalorder %s201, %s203
      %p210 = scmp.eq.s32.totalorder %s25, 1
      %p211 = por %p209, %p210
      %p212 = scmp.ne.s32.totalorder %s203, %s204
      %p213 = scmp.eq.s32.totalorder %s25, 0
      %p214 = por %p212, %p213
      %p215 = scmp.ne.s32.totalorder %s203, %s204
      %p216 = scmp.eq.s32.totalorder %s26, 1
      %p217 = por %p215, %p216
      %p219 = scmp.ne.s32.totalorder %s204, %s218
      %p220 = scmp.eq.s32.totalorder %s26, 0
      %p221 = por %p219, %p220
      %s223 = sadd.s32 %s222, 1
      %p226 = scmp.eq.s32.totalorder %s20, 1
      %p227 = scmp.ne.s32.totalorder %s222, %s224
      %p228 = scmp.eq.s32.totalorder %s20, 0
      %p229 = por %p227, %p228
      %p230 = scmp.ne.s32.totalorder %s222, %s224
      %p231 = scmp.eq.s32.totalorder %s25, 1
      %p232 = por %p230, %p231
      %p233 = scmp.ne.s32.totalorder %s224, %s225
      %p234 = scmp.eq.s32.totalorder %s25, 0
      %p235 = por %p233, %p234
      %p236 = scmp.ne.s32.totalorder %s224, %s225
      %p237 = scmp.eq.s32.totalorder %s26, 1
      %p238 = por %p236, %p237
      %p240 = scmp.ne.s32.totalorder %s225, %s239
      %p241 = scmp.eq.s32.totalorder %s26, 0
      %p242 = por %p240, %p241
      %s244 = sadd.s32 %s243, 1
      %p247 = scmp.eq.s32.totalorder %s20, 1
      %p248 = scmp.ne.s32.totalorder %s243, %s245
      %p249 = scmp.eq.s32.totalorder %s20, 0
      %p250 = por %p248, %p249
      %p251 = scmp.ne.s32.totalorder %s243, %s245
      %p252 = scmp.eq.s32.totalorder %s25, 1
      %p253 = por %p251, %p252
      %p254 = scmp.ne.s32.totalorder %s245, %s246
      %p255 = scmp.eq.s32.totalorder %s25, 0
      %p256 = por %p254, %p255
      %p257 = scmp.ne.s32.totalorder %s245, %s246
      %p258 = scmp.eq.s32.totalorder %s26, 1
      %p259 = por %p257, %p258
      %p261 = scmp.ne.s32.totalorder %s246, %s260
      %p262 = scmp.eq.s32.totalorder %s26, 0
      %p263 = por %p261, %p262
      %s264 = ssub.s32 %s20, %s27
      %p265 = scmp.eq.s32.totalorder %s264, 0
      %s267 = sadd.s32 %s266, 1
      %s268 = scalar_select %p265, %s266, %s267
      %p271 = pneg %p265
      %p272 = scmp.eq.s32.totalorder %s20, 1
      %p273 = por %p271, %p272
      %p274 = scmp.ne.s32.totalorder %s266, %s269
      %p275 = scmp.eq.s32.totalorder %s20, 0
      %p276 = por %p274, %p275
      %p277 = scmp.ne.s32.totalorder %s266, %s269
      %p278 = scmp.eq.s32.totalorder %s25, 1
      %p279 = por %p277, %p278
      %p280 = scmp.ne.s32.totalorder %s269, %s270
      %p281 = scmp.eq.s32.totalorder %s25, 0
      %p282 = por %p280, %p281
      %p283 = scmp.ne.s32.totalorder %s269, %s270
      %p284 = scmp.eq.s32.totalorder %s26, 1
      %p285 = por %p283, %p284
      %p287 = scmp.ne.s32.totalorder %s270, %s286
      %p288 = scmp.eq.s32.totalorder %s26, 0
      %p289 = por %p287, %p288
      %p290 = scmp.le.s32.totalorder 1, %s20
      %p291 = scmp.lt.s32.totalorder %s20, 3
      %p292 = pnand %p290, %p291
      %p293 = pneg %p292
      // Predicated region
      $region9: #{fused_forward.1} parent=5 // pred_check
        _
      $region10: #{fused_forward.1} parent=5 // pred_check_branch
        %295 = sbr.rel (%p292) target = $region12
      $region11: #{fused_forward.1} parent=5 // pred_region
        %s296 = ssub.s32 %s20, 1
        // Predicated region
        $region13: #{fused_forward.1} parent=11 // pred_check
          %p297 = pneg %p67
        $region14: #{fused_forward.1} parent=11 // pred_check_branch
          %299 = sbr.rel (%p297) target = $region16
        $region15: #{fused_forward.1} parent=11 // pred_region
          _
        $region16: #{fused_forward.1} parent=11 // pred_fallthru
          _
        // Predicated region
        $region17: #{fused_forward.1} parent=11 // pred_check
          %p300 = pneg %p88
        $region18: #{fused_forward.1} parent=11 // pred_check_branch
          %302 = sbr.rel (%p300) target = $region20
        $region19: #{fused_forward.1} parent=11 // pred_region
          _
        $region20: #{fused_forward.1} parent=11 // pred_fallthru
          _
        // Predicated region
        $region21: #{fused_forward.1} parent=11 // pred_check
          %p303 = pneg %p109
        $region22: #{fused_forward.1} parent=11 // pred_check_branch
          %305 = sbr.rel (%p303) target = $region24
        $region23: #{fused_forward.1} parent=11 // pred_region
          _
        $region24: #{fused_forward.1} parent=11 // pred_fallthru
          _
        // Predicated region
        $region25: #{fused_forward.1} parent=11 // pred_check
          %p306 = pneg %p130
        $region26: #{fused_forward.1} parent=11 // pred_check_branch
          %308 = sbr.rel (%p306) target = $region28
        $region27: #{fused_forward.1} parent=11 // pred_region
          _
        $region28: #{fused_forward.1} parent=11 // pred_fallthru
          _
        // Predicated region
        $region29: #{fused_forward.1} parent=11 // pred_check
          %p309 = pneg %p151
        $region30: #{fused_forward.1} parent=11 // pred_check_branch
          %311 = sbr.rel (%p309) target = $region32
        $region31: #{fused_forward.1} parent=11 // pred_region
          _
        $region32: #{fused_forward.1} parent=11 // pred_fallthru
          _
        // Predicated region
        $region33: #{fused_forward.1} parent=11 // pred_check
          %p312 = pneg %p172
        $region34: #{fused_forward.1} parent=11 // pred_check_branch
          %314 = sbr.rel (%p312) target = $region36
        $region35: #{fused_forward.1} parent=11 // pred_region
          _
        $region36: #{fused_forward.1} parent=11 // pred_fallthru
          _
        // Predicated region
        $region37: #{fused_forward.1} parent=11 // pred_check
          %p315 = pneg %p193
        $region38: #{fused_forward.1} parent=11 // pred_check_branch
          %317 = sbr.rel (%p315) target = $region40
        $region39: #{fused_forward.1} parent=11 // pred_region
          _
        $region40: #{fused_forward.1} parent=11 // pred_fallthru
          _
        // Predicated region
        $region41: #{fused_forward.1} parent=11 // pred_check
          %p318 = pneg %p214
        $region42: #{fused_forward.1} parent=11 // pred_check_branch
          %320 = sbr.rel (%p318) target = $region44
        $region43: #{fused_forward.1} parent=11 // pred_region
          _
        $region44: #{fused_forward.1} parent=11 // pred_fallthru
          _
        // Predicated region
        $region45: #{fused_forward.1} parent=11 // pred_check
          %p321 = pneg %p235
        $region46: #{fused_forward.1} parent=11 // pred_check_branch
          %323 = sbr.rel (%p321) target = $region48
        $region47: #{fused_forward.1} parent=11 // pred_region
          _
        $region48: #{fused_forward.1} parent=11 // pred_fallthru
          _
        // Predicated region
        $region49: #{fused_forward.1} parent=11 // pred_check
          %p324 = pneg %p256
        $region50: #{fused_forward.1} parent=11 // pred_check_branch
          %326 = sbr.rel (%p324) target = $region52
        $region51: #{fused_forward.1} parent=11 // pred_region
          _
        $region52: #{fused_forward.1} parent=11 // pred_fallthru
          _
      $region12: #{fused_forward.1} parent=5 // pred_fallthru
        _
      %p327 = scmp.lt.s32.totalorder %s20, 2
      // Predicated region
      $region53: #{fused_forward.1} parent=5 // pred_check
        %p328 = pneg %p327
      $region54: #{fused_forward.1} parent=5 // pred_check_branch
        %330 = sbr.rel (%p328) target = $region56
      $region55: #{fused_forward.1} parent=5 // pred_region
        // Predicated region
        $region57: #{fused_forward.1} parent=55 // pred_check
          %p331 = pneg %p40
        $region58: #{fused_forward.1} parent=55 // pred_check_branch
          %333 = sbr.rel (%p331) target = $region60
        $region59: #{fused_forward.1} parent=55 // pred_region
          %p334 = scmp.lt.s32.totalorder %s20, 1
          %s335 = scalar_select %p334, %s20, 1
          %s336 = smul.addr %s335, 32
          %s337 = smul.addr %s336, 8
          %s338 = scalar_lea.vmem %s0, %s337
        $region60: #{fused_forward.1} parent=55 // pred_fallthru
          _
      $region56: #{fused_forward.1} parent=5 // pred_fallthru
        _
      %p339 = scmp.le.s32.totalorder 1, %s20
      %p340 = scmp.lt.s32.totalorder %s20, 3
      %p341 = pnand %p339, %p340
      %p342 = pneg %p341
      // Predicated region
      $region61: #{fused_forward.1} parent=5 // pred_check
        _
      $region62: #{fused_forward.1} parent=5 // pred_check_branch
        %344 = sbr.rel (%p341) target = $region64
      $region63: #{fused_forward.1} parent=5 // pred_region
        %s345 = ssub.s32 %s20, 1
        %p346 = scmp.lt.s32.totalorder %s25, 1
        %s347 = scalar_select %p346, %s25, 1
        %s348 = smul.addr %s347, 32
        %s349 = smul.addr %s348, 8
        %s350 = scalar_lea.vmem %s0, %s349
        %p351 = pneg %p46
        %p352 = pneg %p43
        %p353 = pneg %p67
        %p354 = pneg %p64
        %p355 = pneg %p88
        %p356 = pneg %p85
        %p357 = pneg %p109
        %p358 = pneg %p106
        %p359 = pneg %p130
        %p360 = pneg %p127
        %p361 = pneg %p151
        %p362 = pneg %p148
        %p363 = pneg %p172
        %p364 = pneg %p169
        %p365 = pneg %p193
        %p366 = pneg %p190
        %p367 = pneg %p214
        %p368 = pneg %p211
        %p369 = pneg %p235
        %p370 = pneg %p232
        %p371 = pneg %p256
        %p372 = pneg %p253
        %p373 = pneg %p282
        %p374 = pneg %p279
        %s375 = sand.u32 %s269, 1
        %s376 = scalar_lea.sflag [#allocation4], %s375
        %s377 = sand.u32 %s269, 1
        %s378 = scalar_lea.vmem [#allocation3], %s377
        %p379 = scmp.lt.s32.totalorder %s25, 1
        %s380 = scalar_select %p379, %s25, 1
        %s381 = smul.addr %s380, 32
        %s382 = smul.addr %s381, 8
        %s383 = scalar_lea.vmem %s0, %s382
        %v384 = vld [vmem:[%s383] sm:$0xff]
        %v385 = vld [vmem:[%s383 + $0x8] sm:$0xff]
        %v386 = vld [vmem:[%s383 + $0x10] sm:$0xff]
        %v387 = vld [vmem:[%s383 + $0x18] sm:$0xff]
        %v388 = vld [vmem:[%s383 + $0x20] sm:$0xff]
        %v389 = vld [vmem:[%s383 + $0x28] sm:$0xff]
        %v390 = vld [vmem:[%s383 + $0x30] sm:$0xff]
        %v391 = vld [vmem:[%s383 + $0x38] sm:$0xff]
        %v392 = vld [vmem:[%s383 + $0x40] sm:$0xff]
        %v393 = vld [vmem:[%s383 + $0x48] sm:$0xff]
        %v394 = vld [vmem:[%s383 + $0x50] sm:$0xff]
        %v395 = vld [vmem:[%s383 + $0x58] sm:$0xff]
        %v396 = vld [vmem:[%s383 + $0x60] sm:$0xff]
        %v397 = vld [vmem:[%s383 + $0x68] sm:$0xff]
        %v398 = vld [vmem:[%s383 + $0x70] sm:$0xff]
        %v399 = vld [vmem:[%s383 + $0x78] sm:$0xff]
        %v400 = vld [vmem:[%s383 + $0x80] sm:$0xff]
        %v401 = vld [vmem:[%s383 + $0x88] sm:$0xff]
        %v402 = vld [vmem:[%s383 + $0x90] sm:$0xff]
        %v403 = vld [vmem:[%s383 + $0x98] sm:$0xff]
        %v404 = vld [vmem:[%s383 + $0xa0] sm:$0xff]
        %v405 = vld [vmem:[%s383 + $0xa8] sm:$0xff]
        %v406 = vld [vmem:[%s383 + $0xb0] sm:$0xff]
        %v407 = vld [vmem:[%s383 + $0xb8] sm:$0xff]
        %v408 = vld [vmem:[%s383 + $0xc0] sm:$0xff]
        %v409 = vld [vmem:[%s383 + $0xc8] sm:$0xff]
        %v410 = vld [vmem:[%s383 + $0xd0] sm:$0xff]
        %v411 = vld [vmem:[%s383 + $0xd8] sm:$0xff]
        %v412 = vld [vmem:[%s383 + $0xe0] sm:$0xff]
        %v413 = vld [vmem:[%s383 + $0xe8] sm:$0xff]
        %v414 = vld [vmem:[%s383 + $0xf0] sm:$0xff]
        %v415 = vld [vmem:[%s383 + $0xf8] sm:$0xff]
        %v416 = vld [vmem:[%s1] sm:$0xff]
        %v417 = vld [vmem:[%s1 + $0x8] sm:$0x1]
        %v418 = vld [vmem:[%s2] sm:$0x1]
        %v420 = vlaneseq
        %v421 = vshrl.u32 %v420, 7
        %v422 = vsub.s32 0, %v421
        %v423 = vrot.slane %v418, %v422
        %vm425 = vcmask 72704
        %v427 = vsel %vm425, %v384, 0
        %v430 = vsel %vm425, %v385, 0
        %v433 = vsel %vm425, %v386, 0
        %v436 = vsel %vm425, %v387, 0
        %v439 = vsel %vm425, %v388, 0
        %v442 = vsel %vm425, %v389, 0
        %v445 = vsel %vm425, %v390, 0
        %v448 = vsel %vm425, %v391, 0
        %v451 = vsel %vm425, %v392, 0
        %v454 = vsel %vm425, %v393, 0
        %v457 = vsel %vm425, %v394, 0
        %v460 = vsel %vm425, %v395, 0
        %v463 = vsel %vm425, %v396, 0
        %v466 = vsel %vm425, %v397, 0
        %v469 = vsel %vm425, %v398, 0
        %v472 = vsel %vm425, %v399, 0
        %v475 = vsel %vm425, %v400, 0
        %v478 = vsel %vm425, %v401, 0
        %v481 = vsel %vm425, %v402, 0
        %v484 = vsel %vm425, %v403, 0
        %v487 = vsel %vm425, %v404, 0
        %v490 = vsel %vm425, %v405, 0
        %v493 = vsel %vm425, %v406, 0
        %v496 = vsel %vm425, %v407, 0
        %v499 = vsel %vm425, %v408, 0
        %v502 = vsel %vm425, %v409, 0
        %v505 = vsel %vm425, %v410, 0
        %v508 = vsel %vm425, %v411, 0
        %v511 = vsel %vm425, %v412, 0
        %v514 = vsel %vm425, %v413, 0
        %v517 = vsel %vm425, %v414, 0
        %v520 = vsel %vm425, %v415, 0
        %vm522 = vcmask 1040384
        %v524 = vsel %vm522, %v417, 0
        %526 = vmatprep.subr.mxu0 0.0
        %527 = vmatpush1.msra.mxu0 %v416
        %528 = vmatprep.subr.mxu0 0.0
        %529 = vmatpush1.msra.mxu0 %v524
        %530 = vmatprep.subr.mxu0 0.0
        %531 = vmatpush1.msra.mxu0 0.0
        %532 = vmatprep.subr.mxu0 0.0
        %533 = vmatpush1.msra.mxu0 0.0
        %534 = vmatprep.subr.mxu0 0.0
        %535 = vmatpush1.msra.mxu0 0.0
        %536 = vmatprep.subr.mxu0 0.0
        %537 = vmatpush1.msra.mxu0 0.0
        %538 = vmatprep.subr.mxu0 0.0
        %539 = vmatpush1.msra.mxu0 0.0
        %540 = vmatprep.subr.mxu0 0.0
        %541 = vmatpush1.msra.mxu0 0.0
        %542 = vmatprep.subr.mxu0 0.0
        %543 = vmatpush1.msra.mxu0 0.0
        %544 = vmatprep.subr.mxu0 0.0
        %545 = vmatpush1.msra.mxu0 0.0
        %546 = vmatprep.subr.mxu0 0.0
        %547 = vmatpush1.msra.mxu0 0.0
        %548 = vmatprep.subr.mxu0 0.0
        %549 = vmatpush1.msra.mxu0 0.0
        %550 = vmatprep.subr.mxu0 0.0
        %551 = vmatpush1.msra.mxu0 0.0
        %552 = vmatprep.subr.mxu0 0.0
        %553 = vmatpush1.msra.mxu0 0.0
        %554 = vmatprep.subr.mxu0 0.0
        %555 = vmatpush1.msra.mxu0 0.0
        %556 = vmatprep.subr.mxu0 0.0
        %557 = vmatpush1.msra.mxu0 0.0
        %558 = vmatprep.subr.mxu0 0.0
        %559 = vmatpush1.msra.mxu0 0.0
        %560 = vmatprep.subr.mxu0 0.0
        %561 = vmatpush1.msra.mxu0 0.0
        %562 = vmatprep.subr.mxu0 0.0
        %563 = vmatpush1.msra.mxu0 0.0
        %564 = vmatprep.subr.mxu0 0.0
        %565 = vmatpush1.msra.mxu0 0.0
        %566 = vmatprep.subr.mxu0 0.0
        %567 = vmatpush1.msra.mxu0 0.0
        %568 = vmatprep.subr.mxu0 0.0
        %569 = vmatpush1.msra.mxu0 0.0
        %570 = vmatprep.subr.mxu0 0.0
        %571 = vmatpush1.msra.mxu0 0.0
        %572 = vmatprep.subr.mxu0 0.0
        %573 = vmatpush1.msra.mxu0 0.0
        %574 = vmatprep.subr.mxu0 0.0
        %575 = vmatpush1.msra.mxu0 0.0
        %576 = vmatprep.subr.mxu0 0.0
        %577 = vmatpush1.msra.mxu0 0.0
        %578 = vmatprep.subr.mxu0 0.0
        %579 = vmatpush1.msra.mxu0 0.0
        %580 = vmatprep.subr.mxu0 0.0
        %581 = vmatpush1.msra.mxu0 0.0
        %582 = vmatprep.subr.mxu0 0.0
        %583 = vmatpush1.msra.mxu0 0.0
        %584 = vmatprep.subr.mxu0 0.0
        %585 = vmatpush1.msra.mxu0 0.0
        %586 = vmatprep.subr.mxu0 0.0
        %587 = vmatpush1.msra.mxu0 0.0
        %588 = vmatprep.subr.mxu0 0.0
        %589 = vmatpush1.msra.mxu0 0.0
        %590 = vmatprep.mubr.f32.mxu0 0.0
        %591 = vmatmul.mubr.f32.gmra.mrb[0].mxu0 %v427
        %v592 = vpop.f32.mrb[0].mxu0
        %v593 = vadd.f32 %v423, %v592
        %v594 = vpop.f32.mrb[0].mxu0
        %595 = vmatprep.mubr.f32.mxu0 0.0
        %596 = vmatmul.mubr.f32.gmra.mrb[0].mxu0 %v430
        %v597 = vpop.f32.mrb[0].mxu0
        %v598 = vadd.f32 %v423, %v597
        %v599 = vpop.f32.mrb[0].mxu0
        %600 = vmatprep.mubr.f32.mxu0 0.0
        %601 = vmatmul.mubr.f32.gmra.mrb[0].mxu0 %v433
        %v602 = vpop.f32.mrb[0].mxu0
        %v603 = vadd.f32 %v423, %v602
        %v604 = vpop.f32.mrb[0].mxu0
        %605 = vmatprep.mubr.f32.mxu0 0.0
        %606 = vmatmul.mubr.f32.gmra.mrb[0].mxu0 %v436
        %v607 = vpop.f32.mrb[0].mxu0
        %v608 = vadd.f32 %v423, %v607
        %v609 = vpop.f32.mrb[0].mxu0
        %610 = vmatprep.mubr.f32.mxu0 0.0
        %611 = vmatmul.mubr.f32.gmra.mrb[0].mxu0 %v439
        %v612 = vpop.f32.mrb[0].mxu0
        %v613 = vadd.f32 %v423, %v612
        %v614 = vpop.f32.mrb[0].mxu0
        %615 = vmatprep.mubr.f32.mxu0 0.0
        %616 = vmatmul.mubr.f32.gmra.mrb[0].mxu0 %v442
        %v617 = vpop.f32.mrb[0].mxu0
        %v618 = vadd.f32 %v423, %v617
        %v619 = vpop.f32.mrb[0].mxu0
        %620 = vmatprep.mubr.f32.mxu0 0.0
        %621 = vmatmul.mubr.f32.gmra.mrb[0].mxu0 %v445
        %v622 = vpop.f32.mrb[0].mxu0
        %v623 = vadd.f32 %v423, %v622
        %v624 = vpop.f32.mrb[0].mxu0
        %625 = vmatprep.mubr.f32.mxu0 0.0
        %626 = vmatmul.mubr.f32.gmra.mrb[0].mxu0 %v448
        %v627 = vpop.f32.mrb[0].mxu0
        %v628 = vadd.f32 %v423, %v627
        %v629 = vpop.f32.mrb[0].mxu0
        %630 = vmatprep.mubr.f32.mxu0 0.0
        %631 = vmatmul.mubr.f32.gmra.mrb[0].mxu0 %v451
        %v632 = vpop.f32.mrb[0].mxu0
        %v633 = vadd.f32 %v423, %v632
        %v634 = vpop.f32.mrb[0].mxu0
        %635 = vmatprep.mubr.f32.mxu0 0.0
        %636 = vmatmul.mubr.f32.gmra.mrb[0].mxu0 %v454
        %v637 = vpop.f32.mrb[0].mxu0
        %v638 = vadd.f32 %v423, %v637
        %v639 = vpop.f32.mrb[0].mxu0
        %640 = vmatprep.mubr.f32.mxu0 0.0
        %641 = vmatmul.mubr.f32.gmra.mrb[0].mxu0 %v457
        %v642 = vpop.f32.mrb[0].mxu0
        %v643 = vadd.f32 %v423, %v642
        %v644 = vpop.f32.mrb[0].mxu0
        %645 = vmatprep.mubr.f32.mxu0 0.0
        %646 = vmatmul.mubr.f32.gmra.mrb[0].mxu0 %v460
        %v647 = vpop.f32.mrb[0].mxu0
        %v648 = vadd.f32 %v423, %v647
        %v649 = vpop.f32.mrb[0].mxu0
        %650 = vmatprep.mubr.f32.mxu0 0.0
        %651 = vmatmul.mubr.f32.gmra.mrb[0].mxu0 %v463
        %v652 = vpop.f32.mrb[0].mxu0
        %v653 = vadd.f32 %v423, %v652
        %v654 = vpop.f32.mrb[0].mxu0
        %655 = vmatprep.mubr.f32.mxu0 0.0
        %656 = vmatmul.mubr.f32.gmra.mrb[0].mxu0 %v466
        %v657 = vpop.f32.mrb[0].mxu0
        %v658 = vadd.f32 %v423, %v657
        %v659 = vpop.f32.mrb[0].mxu0
        %660 = vmatprep.mubr.f32.mxu0 0.0
        %661 = vmatmul.mubr.f32.gmra.mrb[0].mxu0 %v469
        %v662 = vpop.f32.mrb[0].mxu0
        %v663 = vadd.f32 %v423, %v662
        %v664 = vpop.f32.mrb[0].mxu0
        %665 = vmatprep.mubr.f32.mxu0 0.0
        %666 = vmatmul.mubr.f32.gmra.mrb[0].mxu0 %v472
        %v667 = vpop.f32.mrb[0].mxu0
        %v668 = vadd.f32 %v423, %v667
        %v669 = vpop.f32.mrb[0].mxu0
        %670 = vmatprep.mubr.f32.mxu0 0.0
        %671 = vmatmul.mubr.f32.gmra.mrb[0].mxu0 %v475
        %v672 = vpop.f32.mrb[0].mxu0
        %v673 = vadd.f32 %v423, %v672
        %v674 = vpop.f32.mrb[0].mxu0
        %675 = vmatprep.mubr.f32.mxu0 0.0
        %676 = vmatmul.mubr.f32.gmra.mrb[0].mxu0 %v478
        %v677 = vpop.f32.mrb[0].mxu0
        %v678 = vadd.f32 %v423, %v677
        %v679 = vpop.f32.mrb[0].mxu0
        %680 = vmatprep.mubr.f32.mxu0 0.0
        %681 = vmatmul.mubr.f32.gmra.mrb[0].mxu0 %v481
        %v682 = vpop.f32.mrb[0].mxu0
        %v683 = vadd.f32 %v423, %v682
        %v684 = vpop.f32.mrb[0].mxu0
        %685 = vmatprep.mubr.f32.mxu0 0.0
        %686 = vmatmul.mubr.f32.gmra.mrb[0].mxu0 %v484
        %v687 = vpop.f32.mrb[0].mxu0
        %v688 = vadd.f32 %v423, %v687
        %v689 = vpop.f32.mrb[0].mxu0
        %690 = vmatprep.mubr.f32.mxu0 0.0
        %691 = vmatmul.mubr.f32.gmra.mrb[0].mxu0 %v487
        %v692 = vpop.f32.mrb[0].mxu0
        %v693 = vadd.f32 %v423, %v692
        %v694 = vpop.f32.mrb[0].mxu0
        %695 = vmatprep.mubr.f32.mxu0 0.0
        %696 = vmatmul.mubr.f32.gmra.mrb[0].mxu0 %v490
        %v697 = vpop.f32.mrb[0].mxu0
        %v698 = vadd.f32 %v423, %v697
        %v699 = vpop.f32.mrb[0].mxu0
        %700 = vmatprep.mubr.f32.mxu0 0.0
        %701 = vmatmul.mubr.f32.gmra.mrb[0].mxu0 %v493
        %v702 = vpop.f32.mrb[0].mxu0
        %v703 = vadd.f32 %v423, %v702
        %v704 = vpop.f32.mrb[0].mxu0
        %705 = vmatprep.mubr.f32.mxu0 0.0
        %706 = vmatmul.mubr.f32.gmra.mrb[0].mxu0 %v496
        %v707 = vpop.f32.mrb[0].mxu0
        %v708 = vadd.f32 %v423, %v707
        %v709 = vpop.f32.mrb[0].mxu0
        %710 = vmatprep.mubr.f32.mxu0 0.0
        %711 = vmatmul.mubr.f32.gmra.mrb[0].mxu0 %v499
        %v712 = vpop.f32.mrb[0].mxu0
        %v713 = vadd.f32 %v423, %v712
        %v714 = vpop.f32.mrb[0].mxu0
        %715 = vmatprep.mubr.f32.mxu0 0.0
        %716 = vmatmul.mubr.f32.gmra.mrb[0].mxu0 %v502
        %v717 = vpop.f32.mrb[0].mxu0
        %v718 = vadd.f32 %v423, %v717
        %v719 = vpop.f32.mrb[0].mxu0
        %720 = vmatprep.mubr.f32.mxu0 0.0
        %721 = vmatmul.mubr.f32.gmra.mrb[0].mxu0 %v505
        %v722 = vpop.f32.mrb[0].mxu0
        %v723 = vadd.f32 %v423, %v722
        %v724 = vpop.f32.mrb[0].mxu0
        %725 = vmatprep.mubr.f32.mxu0 0.0
        %726 = vmatmul.mubr.f32.gmra.mrb[0].mxu0 %v508
        %v727 = vpop.f32.mrb[0].mxu0
        %v728 = vadd.f32 %v423, %v727
        %v729 = vpop.f32.mrb[0].mxu0
        %730 = vmatprep.mubr.f32.mxu0 0.0
        %731 = vmatmul.mubr.f32.gmra.mrb[0].mxu0 %v511
        %v732 = vpop.f32.mrb[0].mxu0
        %v733 = vadd.f32 %v423, %v732
        %v734 = vpop.f32.mrb[0].mxu0
        %735 = vmatprep.mubr.f32.mxu0 0.0
        %736 = vmatmul.mubr.f32.gmra.mrb[0].mxu0 %v514
        %v737 = vpop.f32.mrb[0].mxu0
        %v738 = vadd.f32 %v423, %v737
        %v739 = vpop.f32.mrb[0].mxu0
        %740 = vmatprep.mubr.f32.mxu0 0.0
        %741 = vmatmul.mubr.f32.gmra.mrb[0].mxu0 %v517
        %v742 = vpop.f32.mrb[0].mxu0
        %v743 = vadd.f32 %v423, %v742
        %v744 = vpop.f32.mrb[0].mxu0
        %745 = vmatprep.mubr.f32.mxu0 0.0
        %746 = vmatmul.mubr.f32.gmra.mrb[0].mxu0 %v520
        %v747 = vpop.f32.mrb[0].mxu0
        %v748 = vadd.f32 %v423, %v747
        %v749 = vpop.f32.mrb[0].mxu0
        %750 = vdwg.mxu0
        %v751 = vmax.f32 %v593, 0.0
        %v752 = vmax.f32 %v598, 0.0
        %v753 = vmax.f32 %v603, 0.0
        %v754 = vmax.f32 %v608, 0.0
        %v755 = vmax.f32 %v613, 0.0
        %v756 = vmax.f32 %v618, 0.0
        %v757 = vmax.f32 %v623, 0.0
        %v758 = vmax.f32 %v628, 0.0
        %v759 = vmax.f32 %v633, 0.0
        %v760 = vmax.f32 %v638, 0.0
        %v761 = vmax.f32 %v643, 0.0
        %v762 = vmax.f32 %v648, 0.0
        %v763 = vmax.f32 %v653, 0.0
        %v764 = vmax.f32 %v658, 0.0
        %v765 = vmax.f32 %v663, 0.0
        %v766 = vmax.f32 %v668, 0.0
        %v767 = vmax.f32 %v673, 0.0
        %v768 = vmax.f32 %v678, 0.0
        %v769 = vmax.f32 %v683, 0.0
        %v770 = vmax.f32 %v688, 0.0
        %v771 = vmax.f32 %v693, 0.0
        %v772 = vmax.f32 %v698, 0.0
        %v773 = vmax.f32 %v703, 0.0
        %v774 = vmax.f32 %v708, 0.0
        %v775 = vmax.f32 %v713, 0.0
        %v776 = vmax.f32 %v718, 0.0
        %v777 = vmax.f32 %v723, 0.0
        %v778 = vmax.f32 %v728, 0.0
        %v779 = vmax.f32 %v733, 0.0
        %v780 = vmax.f32 %v738, 0.0
        %v781 = vmax.f32 %v743, 0.0
        %v782 = vmax.f32 %v748, 0.0
        %v783 = vmax.f32 %v751, %v759
        %v784 = vmax.f32 %v752, %v760
        %v785 = vmax.f32 %v753, %v761
        %v786 = vmax.f32 %v754, %v762
        %v787 = vmax.f32 %v755, %v763
        %v788 = vmax.f32 %v756, %v764
        %v789 = vmax.f32 %v757, %v765
        %v790 = vmax.f32 %v758, %v766
        %v791 = vmax.f32 %v767, %v775
        %v792 = vmax.f32 %v768, %v776
        %v793 = vmax.f32 %v769, %v777
        %v794 = vmax.f32 %v770, %v778
        %v795 = vmax.f32 %v771, %v779
        %v796 = vmax.f32 %v772, %v780
        %v797 = vmax.f32 %v773, %v781
        %v798 = vmax.f32 %v774, %v782
        %v799 = vmax.f32 %v783, %v791
        %v800 = vmax.f32 %v784, %v792
        %v801 = vmax.f32 %v785, %v793
        %v802 = vmax.f32 %v786, %v794
        %v803 = vmax.f32 %v787, %v795
        %v804 = vmax.f32 %v788, %v796
        %v805 = vmax.f32 %v789, %v797
        %v806 = vmax.f32 %v790, %v798
        %vm807 = vcmask 130048
        %808 = vst.msk [vmem:[#allocation2] sm:$0xff] %vm807, 0.0
        %vm809 = vcmask 123904
        %810 = vst.msk [vmem:[#allocation2 + $0x8] sm:$0x3] %vm809, 0.0
        %811 = vst.msk [vmem:[#allocation2 + $0x10] sm:$0xff] %vm807, 0.0
        %812 = vst.msk [vmem:[#allocation2 + $0x18] sm:$0x3] %vm809, 0.0
        %813 = vst.msk [vmem:[#allocation2 + $0x20] sm:$0xff] %vm807, 0.0
        %814 = vst.msk [vmem:[#allocation2 + $0x28] sm:$0x3] %vm809, 0.0
        %815 = vst.msk [vmem:[#allocation2 + $0x30] sm:$0xff] %vm807, 0.0
        %816 = vst.msk [vmem:[#allocation2 + $0x38] sm:$0x3] %vm809, 0.0
        %817 = vst.msk [vmem:[#allocation2 + $0x40] sm:$0xff] %vm807, 0.0
        %818 = vst.msk [vmem:[#allocation2 + $0x48] sm:$0x3] %vm809, 0.0
        %819 = vst.msk [vmem:[#allocation2 + $0x50] sm:$0xff] %vm807, 0.0
        %820 = vst.msk [vmem:[#allocation2 + $0x58] sm:$0x3] %vm809, 0.0
        %821 = vst.msk [vmem:[#allocation2 + $0x60] sm:$0xff] %vm807, 0.0
        %822 = vst.msk [vmem:[#allocation2 + $0x68] sm:$0x3] %vm809, 0.0
        %823 = vst.msk [vmem:[#allocation2 + $0x70] sm:$0xff] %vm807, 0.0
        %824 = vst.msk [vmem:[#allocation2 + $0x78] sm:$0x3] %vm809, 0.0
        %825 = vst.msk [vmem:[#allocation2 + $0x80] sm:$0xff] %vm807, 0.0
        %826 = vst.msk [vmem:[#allocation2 + $0x88] sm:$0x3] %vm809, 0.0
        %827 = vst.msk [vmem:[#allocation2 + $0x90] sm:$0xff] %vm807, 0.0
        %828 = vst.msk [vmem:[#allocation2 + $0x98] sm:$0x3] %vm809, 0.0
        %s829 = scalar_lea.vmem [#allocation2], 16
        %830 = vst.msk [vmem:[%s829 + $0x1] sm:$0xff] %vm807, %v799
        %s831 = scalar_lea.vmem [#allocation2], 32
        %832 = vst.msk [vmem:[%s831 + $0x1] sm:$0xff] %vm807, %v800
        %s833 = scalar_lea.vmem [#allocation2], 48
        %834 = vst.msk [vmem:[%s833 + $0x1] sm:$0xff] %vm807, %v801
        %s835 = scalar_lea.vmem [#allocation2], 64
        %836 = vst.msk [vmem:[%s835 + $0x1] sm:$0xff] %vm807, %v802
        %s837 = scalar_lea.vmem [#allocation2], 80
        %838 = vst.msk [vmem:[%s837 + $0x1] sm:$0xff] %vm807, %v803
        %s839 = scalar_lea.vmem [#allocation2], 96
        %840 = vst.msk [vmem:[%s839 + $0x1] sm:$0xff] %vm807, %v804
        %s841 = scalar_lea.vmem [#allocation2], 112
        %842 = vst.msk [vmem:[%s841 + $0x1] sm:$0xff] %vm807, %v805
        %s843 = scalar_lea.vmem [#allocation2], 128
        %844 = vst.msk [vmem:[%s843 + $0x1] sm:$0xff] %vm807, %v806
        %v845 = vld [vmem:[%s3] sm:$0xff]
        %v846 = vld [vmem:[%s3 + $0x8] sm:$0xff]
        %v847 = vld [vmem:[%s3 + $0x10] sm:$0xff]
        %v848 = vld [vmem:[%s3 + $0x18] sm:$0xff]
        %v849 = vld [vmem:[%s3 + $0x20] sm:$0xff]
        %v850 = vld [vmem:[%s3 + $0x28] sm:$0xff]
        %v851 = vld [vmem:[%s3 + $0x30] sm:$0xff]
        %v852 = vld [vmem:[%s3 + $0x38] sm:$0xff]
        %v853 = vld [vmem:[%s3 + $0x40] sm:$0xff]
        %v854 = vld [vmem:[%s3 + $0x48] sm:$0xff]
        %v855 = vld [vmem:[%s3 + $0x50] sm:$0xff]
        %v856 = vld [vmem:[%s3 + $0x58] sm:$0xff]
        %v857 = vld [vmem:[%s3 + $0x60] sm:$0xff]
        %v858 = vld [vmem:[%s3 + $0x68] sm:$0xff]
        %v859 = vld [vmem:[%s3 + $0x70] sm:$0xff]
        %v860 = vld [vmem:[%s3 + $0x78] sm:$0xff]
        %v861 = vld [vmem:[%s3 + $0x80] sm:$0xff]
        %v862 = vld [vmem:[%s3 + $0x88] sm:$0xff]
        %v863 = vld [vmem:[#allocation2] sm:$0xff]
        %v864 = vld [vmem:[%s829] sm:$0xff]
        %v865 = vld [vmem:[%s831] sm:$0xff]
        %v866 = vld [vmem:[#allocation2 + $0x1] sm:$0xff]
        %v867 = vld [vmem:[%s829 + $0x1] sm:$0xff]
        %v868 = vld [vmem:[%s831 + $0x1] sm:$0xff]
        %v869 = vld [vmem:[#allocation2 + $0x2] sm:$0xff]
        %v870 = vld [vmem:[%s829 + $0x2] sm:$0xff]
        %v871 = vld [vmem:[%s831 + $0x2] sm:$0xff]
        %873 = vrot.lane.b32.xlu0 %v864, 16
        %v874 = vpop.permute.xlu0 %873
        %877 = vrot.lane.b32.xlu0 %v865, 32
        %v878 = vpop.permute.xlu0 %877
        %881 = vrot.lane.b32.xlu0 %v866, 48
        %v882 = vpop.permute.xlu0 %881
        %885 = vrot.lane.b32.xlu0 %v867, 64
        %v886 = vpop.permute.xlu0 %885
        %889 = vrot.lane.b32.xlu0 %v868, 80
        %v890 = vpop.permute.xlu0 %889
        %893 = vrot.lane.b32.xlu0 %v869, 96
        %v894 = vpop.permute.xlu0 %893
        %897 = vrot.lane.b32.xlu0 %v870, 112
        %v898 = vpop.permute.xlu0 %897
        %v900 = vsel %vm807, %v863, %v874
        %vm901 = vcmask 261120
        %v902 = vsel %vm901, %v900, %v878
        %vm903 = vcmask 392192
        %v904 = vsel %vm903, %v902, %v882
        %vm905 = vcmask 523264
        %v906 = vsel %vm905, %v904, %v886
        %vm907 = vcmask 654336
        %v908 = vsel %vm907, %v906, %v890
        %vm909 = vcmask 785408
        %v910 = vsel %vm909, %v908, %v894
        %vm911 = vcmask 916480
        %v912 = vsel %vm911, %v910, %v898
        %v913 = vld [vmem:[%s833] sm:$0xff]
        %v914 = vld [vmem:[%s835] sm:$0xff]
        %v915 = vld [vmem:[%s833 + $0x1] sm:$0xff]
        %v916 = vld [vmem:[%s835 + $0x1] sm:$0xff]
        %v917 = vld [vmem:[%s833 + $0x2] sm:$0xff]
        %v918 = vld [vmem:[%s835 + $0x2] sm:$0xff]
        %920 = vrot.lane.b32.xlu0 %v913, 16
        %v921 = vpop.permute.xlu0 %920
        %924 = vrot.lane.b32.xlu0 %v914, 32
        %v925 = vpop.permute.xlu0 %924
        %927 = vrot.lane.b32.xlu0 %v868, 48
        %v928 = vpop.permute.xlu0 %927
        %931 = vrot.lane.b32.xlu0 %v915, 64
        %v932 = vpop.permute.xlu0 %931
        %935 = vrot.lane.b32.xlu0 %v916, 80
        %v936 = vpop.permute.xlu0 %935
        %939 = vrot.lane.b32.xlu0 %v871, 96
        %v940 = vpop.permute.xlu0 %939
        %943 = vrot.lane.b32.xlu0 %v917, 112
        %v944 = vpop.permute.xlu0 %943
        %v946 = vsel %vm807, %v865, %v921
        %v947 = vsel %vm901, %v946, %v925
        %v948 = vsel %vm903, %v947, %v928
        %v949 = vsel %vm905, %v948, %v932
        %v950 = vsel %vm907, %v949, %v936
        %v951 = vsel %vm909, %v950, %v940
        %v952 = vsel %vm911, %v951, %v944
        %v953 = vld [vmem:[%s837] sm:$0xff]
        %v954 = vld [vmem:[%s839] sm:$0xff]
        %v955 = vld [vmem:[%s837 + $0x1] sm:$0xff]
        %v956 = vld [vmem:[%s839 + $0x1] sm:$0xff]
        %v957 = vld [vmem:[%s837 + $0x2] sm:$0xff]
        %v958 = vld [vmem:[%s839 + $0x2] sm:$0xff]
        %960 = vrot.lane.b32.xlu0 %v953, 16
        %v961 = vpop.permute.xlu0 %960
        %964 = vrot.lane.b32.xlu0 %v954, 32
        %v965 = vpop.permute.xlu0 %964
        %967 = vrot.lane.b32.xlu0 %v916, 48
        %v968 = vpop.permute.xlu0 %967
        %971 = vrot.lane.b32.xlu0 %v955, 64
        %v972 = vpop.permute.xlu0 %971
        %975 = vrot.lane.b32.xlu0 %v956, 80
        %v976 = vpop.permute.xlu0 %975
        %979 = vrot.lane.b32.xlu0 %v918, 96
        %v980 = vpop.permute.xlu0 %979
        %983 = vrot.lane.b32.xlu0 %v957, 112
        %v984 = vpop.permute.xlu0 %983
        %v986 = vsel %vm807, %v914, %v961
        %v987 = vsel %vm901, %v986, %v965
        %v988 = vsel %vm903, %v987, %v968
        %v989 = vsel %vm905, %v988, %v972
        %v990 = vsel %vm907, %v989, %v976
        %v991 = vsel %vm909, %v990, %v980
        %v992 = vsel %vm911, %v991, %v984
        %v993 = vld [vmem:[%s841] sm:$0xff]
        %v994 = vld [vmem:[%s843] sm:$0xff]
        %v995 = vld [vmem:[%s841 + $0x1] sm:$0xff]
        %v996 = vld [vmem:[%s843 + $0x1] sm:$0xff]
        %v997 = vld [vmem:[%s841 + $0x2] sm:$0xff]
        %v998 = vld [vmem:[%s843 + $0x2] sm:$0xff]
        %1000 = vrot.lane.b32.xlu0 %v993, 16
        %v1001 = vpop.permute.xlu0 %1000
        %1004 = vrot.lane.b32.xlu0 %v994, 32
        %v1005 = vpop.permute.xlu0 %1004
        %1007 = vrot.lane.b32.xlu0 %v956, 48
        %v1008 = vpop.permute.xlu0 %1007
        %1011 = vrot.lane.b32.xlu0 %v995, 64
        %v1012 = vpop.permute.xlu0 %1011
        %1015 = vrot.lane.b32.xlu0 %v996, 80
        %v1016 = vpop.permute.xlu0 %1015
        %1019 = vrot.lane.b32.xlu0 %v958, 96
        %v1020 = vpop.permute.xlu0 %1019
        %1023 = vrot.lane.b32.xlu0 %v997, 112
        %v1024 = vpop.permute.xlu0 %1023
        %v1026 = vsel %vm807, %v954, %v1001
        %v1027 = vsel %vm901, %v1026, %v1005
        %v1028 = vsel %vm903, %v1027, %v1008
        %v1029 = vsel %vm905, %v1028, %v1012
        %v1030 = vsel %vm907, %v1029, %v1016
        %v1031 = vsel %vm909, %v1030, %v1020
        %v1032 = vsel %vm911, %v1031, %v1024
        %v1033 = vsel %vm807, %v871, 0
        %v1035 = vsel %vm807, %v918, 0
        %v1037 = vsel %vm807, %v958, 0
        %v1040 = vsel %vm807, %v998, 0
        %1042 = vmatprep.subr.mxu0 0.0
        %1043 = vmatpush1.msra.mxu0 %v845
        %1044 = vmatprep.subr.mxu0 0.0
        %1045 = vmatpush1.msra.mxu0 %v846
        %1046 = vmatprep.subr.mxu0 0.0
        %1047 = vmatpush1.msra.mxu0 %v847
        %1048 = vmatprep.subr.mxu0 0.0
        %1049 = vmatpush1.msra.mxu0 %v848
        %1050 = vmatprep.subr.mxu0 0.0
        %1051 = vmatpush1.msra.mxu0 %v849
        %1052 = vmatprep.subr.mxu0 0.0
        %1053 = vmatpush1.msra.mxu0 %v850
        %1054 = vmatprep.subr.mxu0 0.0
        %1055 = vmatpush1.msra.mxu0 %v851
        %1056 = vmatprep.subr.mxu0 0.0
        %1057 = vmatpush1.msra.mxu0 %v852
        %1058 = vmatprep.subr.mxu0 0.0
        %1059 = vmatpush1.msra.mxu0 %v853
        %1060 = vmatprep.subr.mxu0 0.0
        %1061 = vmatpush1.msra.mxu0 %v854
        %1062 = vmatprep.subr.mxu0 0.0
        %1063 = vmatpush1.msra.mxu0 %v855
        %1064 = vmatprep.subr.mxu0 0.0
        %1065 = vmatpush1.msra.mxu0 %v856
        %1066 = vmatprep.subr.mxu0 0.0
        %1067 = vmatpush1.msra.mxu0 %v857
        %1068 = vmatprep.subr.mxu0 0.0
        %1069 = vmatpush1.msra.mxu0 %v858
        %1070 = vmatprep.subr.mxu0 0.0
        %1071 = vmatpush1.msra.mxu0 %v859
        %1072 = vmatprep.subr.mxu0 0.0
        %1073 = vmatpush1.msra.mxu0 %v860
        %1074 = vmatprep.subr.mxu0 0.0
        %1075 = vmatpush1.msra.mxu0 %v861
        %1076 = vmatprep.subr.mxu0 0.0
        %1077 = vmatpush1.msra.mxu0 %v862
        %1078 = vmatprep.subr.mxu0 0.0
        %1079 = vmatpush1.msra.mxu0 0.0
        %1080 = vmatprep.subr.mxu0 0.0
        %1081 = vmatpush1.msra.mxu0 0.0
        %1082 = vmatprep.subr.mxu0 0.0
        %1083 = vmatpush1.msra.mxu0 0.0
        %1084 = vmatprep.subr.mxu0 0.0
        %1085 = vmatpush1.msra.mxu0 0.0
        %1086 = vmatprep.subr.mxu0 0.0
        %1087 = vmatpush1.msra.mxu0 0.0
        %1088 = vmatprep.subr.mxu0 0.0
        %1089 = vmatpush1.msra.mxu0 0.0
        %1090 = vmatprep.subr.mxu0 0.0
        %1091 = vmatpush1.msra.mxu0 0.0
        %1092 = vmatprep.subr.mxu0 0.0
        %1093 = vmatpush1.msra.mxu0 0.0
        %1094 = vmatprep.subr.mxu0 0.0
        %1095 = vmatpush1.msra.mxu0 0.0
        %1096 = vmatprep.subr.mxu0 0.0
        %1097 = vmatpush1.msra.mxu0 0.0
        %1098 = vmatprep.subr.mxu0 0.0
        %1099 = vmatpush1.msra.mxu0 0.0
        %1100 = vmatprep.subr.mxu0 0.0
        %1101 = vmatpush1.msra.mxu0 0.0
        %1102 = vmatprep.subr.mxu0 0.0
        %1103 = vmatpush1.msra.mxu0 0.0
        %1104 = vmatprep.subr.mxu0 0.0
        %1105 = vmatpush1.msra.mxu0 0.0
        %1106 = vmatprep.mubr.f32.mxu0 %v1033
        %1107 = vmatmul.mubr.f32.gmra.mrb[0].mxu0 %v912
        %v1108 = vpop.f32.mrb[0].mxu0
        %v1109 = vadd.f32 0.0, %v1108
        %v1110 = vpop.f32.mrb[0].mxu0
        %1111 = vmatprep.mubr.f32.mxu0 %v1035
        %1112 = vmatmul.mubr.f32.gmra.mrb[0].mxu0 %v952
        %v1113 = vpop.f32.mrb[0].mxu0
        %v1114 = vadd.f32 0.0, %v1113
        %v1115 = vpop.f32.mrb[0].mxu0
        %1116 = vmatprep.mubr.f32.mxu0 %v1037
        %1117 = vmatmul.mubr.f32.gmra.mrb[0].mxu0 %v992
        %v1118 = vpop.f32.mrb[0].mxu0
        %v1119 = vadd.f32 0.0, %v1118
        %v1120 = vpop.f32.mrb[0].mxu0
        %1121 = vmatprep.mubr.f32.mxu0 %v1040
        %1122 = vmatmul.mubr.f32.gmra.mrb[0].mxu0 %v1032
        %v1123 = vpop.f32.mrb[0].mxu0
        %v1124 = vadd.f32 0.0, %v1123
        %v1125 = vpop.f32.mrb[0].mxu0
        %1126 = vdwg.mxu0
        %1127 = vrot.lane.b32.xlu0 %v865, 16
        %v1128 = vpop.permute.xlu0 %1127
        %1130 = vrot.lane.b32.xlu0 %v913, 32
        %v1131 = vpop.permute.xlu0 %1130
        %1133 = vrot.lane.b32.xlu0 %v867, 48
        %v1134 = vpop.permute.xlu0 %1133
        %1136 = vrot.lane.b32.xlu0 %v868, 64
        %v1137 = vpop.permute.xlu0 %1136
        %1139 = vrot.lane.b32.xlu0 %v915, 80
        %v1140 = vpop.permute.xlu0 %1139
        %1142 = vrot.lane.b32.xlu0 %v870, 96
        %v1143 = vpop.permute.xlu0 %1142
        %1145 = vrot.lane.b32.xlu0 %v871, 112
        %v1146 = vpop.permute.xlu0 %1145
        %v1148 = vsel %vm807, %v864, %v1128
        %v1149 = vsel %vm901, %v1148, %v1131
        %v1150 = vsel %vm903, %v1149, %v1134
        %v1151 = vsel %vm905, %v1150, %v1137
        %v1152 = vsel %vm907, %v1151, %v1140
        %v1153 = vsel %vm909, %v1152, %v1143
        %v1154 = vsel %vm911, %v1153, %v1146
        %1155 = vrot.lane.b32.xlu0 %v914, 16
        %v1156 = vpop.permute.xlu0 %1155
        %1158 = vrot.lane.b32.xlu0 %v953, 32
        %v1159 = vpop.permute.xlu0 %1158
        %1161 = vrot.lane.b32.xlu0 %v915, 48
        %v1162 = vpop.permute.xlu0 %1161
        %1164 = vrot.lane.b32.xlu0 %v916, 64
        %v1165 = vpop.permute.xlu0 %1164
        %1167 = vrot.lane.b32.xlu0 %v955, 80
        %v1168 = vpop.permute.xlu0 %1167
        %1170 = vrot.lane.b32.xlu0 %v917, 96
        %v1171 = vpop.permute.xlu0 %1170
        %1173 = vrot.lane.b32.xlu0 %v918, 112
        %v1174 = vpop.permute.xlu0 %1173
        %v1176 = vsel %vm807, %v913, %v1156
        %v1177 = vsel %vm901, %v1176, %v1159
        %v1178 = vsel %vm903, %v1177, %v1162
        %v1179 = vsel %vm905, %v1178, %v1165
        %v1180 = vsel %vm907, %v1179, %v1168
        %v1181 = vsel %vm909, %v1180, %v1171
        %v1182 = vsel %vm911, %v1181, %v1174
        %1183 = vrot.lane.b32.xlu0 %v954, 16
        %v1184 = vpop.permute.xlu0 %1183
        %1186 = vrot.lane.b32.xlu0 %v993, 32
        %v1187 = vpop.permute.xlu0 %1186
        %1189 = vrot.lane.b32.xlu0 %v955, 48
        %v1190 = vpop.permute.xlu0 %1189
        %1192 = vrot.lane.b32.xlu0 %v956, 64
        %v1193 = vpop.permute.xlu0 %1192
        %1195 = vrot.lane.b32.xlu0 %v995, 80
        %v1196 = vpop.permute.xlu0 %1195
        %1198 = vrot.lane.b32.xlu0 %v957, 96
        %v1199 = vpop.permute.xlu0 %1198
        %1201 = vrot.lane.b32.xlu0 %v958, 112
        %v1202 = vpop.permute.xlu0 %1201
        %v1204 = vsel %vm807, %v953, %v1184
        %v1205 = vsel %vm901, %v1204, %v1187
        %v1206 = vsel %vm903, %v1205, %v1190
        %v1207 = vsel %vm905, %v1206, %v1193
        %v1208 = vsel %vm907, %v1207, %v1196
        %v1209 = vsel %vm909, %v1208, %v1199
        %v1210 = vsel %vm911, %v1209, %v1202
        %s1211 = scalar_lea.vmem [#allocation2], 144
        %v1212 = vld [vmem:[%s1211] sm:$0xff]
        %v1213 = vld [vmem:[%s1211 + $0x1] sm:$0xff]
        %v1214 = vld [vmem:[%s1211 + $0x2] sm:$0xff]
        %1215 = vrot.lane.b32.xlu0 %v994, 16
        %v1216 = vpop.permute.xlu0 %1215
        %1219 = vrot.lane.b32.xlu0 %v1212, 32
        %v1220 = vpop.permute.xlu0 %1219
        %1222 = vrot.lane.b32.xlu0 %v995, 48
        %v1223 = vpop.permute.xlu0 %1222
        %1225 = vrot.lane.b32.xlu0 %v996, 64
        %v1226 = vpop.permute.xlu0 %1225
        %1229 = vrot.lane.b32.xlu0 %v1213, 80
        %v1230 = vpop.permute.xlu0 %1229
        %1232 = vrot.lane.b32.xlu0 %v997, 96
        %v1233 = vpop.permute.xlu0 %1232
        %1235 = vrot.lane.b32.xlu0 %v998, 112
        %v1236 = vpop.permute.xlu0 %1235
        %v1238 = vsel %vm807, %v993, %v1216
        %v1239 = vsel %vm901, %v1238, %v1220
        %v1240 = vsel %vm903, %v1239, %v1223
        %v1241 = vsel %vm905, %v1240, %v1226
        %v1242 = vsel %vm907, %v1241, %v1230
        %v1243 = vsel %vm909, %v1242, %v1233
        %v1244 = vsel %vm911, %v1243, %v1236
        %v1245 = vsel %vm807, %v917, 0
        %v1247 = vsel %vm807, %v957, 0
        %v1249 = vsel %vm807, %v997, 0
        %v1252 = vsel %vm807, %v1214, 0
        %1254 = vmatprep.subr.mxu0 0.0
        %1255 = vmatpush1.msra.mxu0 %v845
        %1256 = vmatprep.subr.mxu0 0.0
        %1257 = vmatpush1.msra.mxu0 %v846
        %1258 = vmatprep.subr.mxu0 0.0
        %1259 = vmatpush1.msra.mxu0 %v847
        %1260 = vmatprep.subr.mxu0 0.0
        %1261 = vmatpush1.msra.mxu0 %v848
        %1262 = vmatprep.subr.mxu0 0.0
        %1263 = vmatpush1.msra.mxu0 %v849
        %1264 = vmatprep.subr.mxu0 0.0
        %1265 = vmatpush1.msra.mxu0 %v850
        %1266 = vmatprep.subr.mxu0 0.0
        %1267 = vmatpush1.msra.mxu0 %v851
        %1268 = vmatprep.subr.mxu0 0.0
        %1269 = vmatpush1.msra.mxu0 %v852
        %1270 = vmatprep.subr.mxu0 0.0
        %1271 = vmatpush1.msra.mxu0 %v853
        %1272 = vmatprep.subr.mxu0 0.0
        %1273 = vmatpush1.msra.mxu0 %v854
        %1274 = vmatprep.subr.mxu0 0.0
        %1275 = vmatpush1.msra.mxu0 %v855
        %1276 = vmatprep.subr.mxu0 0.0
        %1277 = vmatpush1.msra.mxu0 %v856
        %1278 = vmatprep.subr.mxu0 0.0
        %1279 = vmatpush1.msra.mxu0 %v857
        %1280 = vmatprep.subr.mxu0 0.0
        %1281 = vmatpush1.msra.mxu0 %v858
        %1282 = vmatprep.subr.mxu0 0.0
        %1283 = vmatpush1.msra.mxu0 %v859
        %1284 = vmatprep.subr.mxu0 0.0
        %1285 = vmatpush1.msra.mxu0 %v860
        %1286 = vmatprep.subr.mxu0 0.0
        %1287 = vmatpush1.msra.mxu0 %v861
        %1288 = vmatprep.subr.mxu0 0.0
        %1289 = vmatpush1.msra.mxu0 %v862
        %1290 = vmatprep.subr.mxu0 0.0
        %1291 = vmatpush1.msra.mxu0 0.0
        %1292 = vmatprep.subr.mxu0 0.0
        %1293 = vmatpush1.msra.mxu0 0.0
        %1294 = vmatprep.subr.mxu0 0.0
        %1295 = vmatpush1.msra.mxu0 0.0
        %1296 = vmatprep.subr.mxu0 0.0
        %1297 = vmatpush1.msra.mxu0 0.0
        %1298 = vmatprep.subr.mxu0 0.0
        %1299 = vmatpush1.msra.mxu0 0.0
        %1300 = vmatprep.subr.mxu0 0.0
        %1301 = vmatpush1.msra.mxu0 0.0
        %1302 = vmatprep.subr.mxu0 0.0
        %1303 = vmatpush1.msra.mxu0 0.0
        %1304 = vmatprep.subr.mxu0 0.0
        %1305 = vmatpush1.msra.mxu0 0.0
        %1306 = vmatprep.subr.mxu0 0.0
        %1307 = vmatpush1.msra.mxu0 0.0
        %1308 = vmatprep.subr.mxu0 0.0
        %1309 = vmatpush1.msra.mxu0 0.0
        %1310 = vmatprep.subr.mxu0 0.0
        %1311 = vmatpush1.msra.mxu0 0.0
        %1312 = vmatprep.subr.mxu0 0.0
        %1313 = vmatpush1.msra.mxu0 0.0
        %1314 = vmatprep.subr.mxu0 0.0
        %1315 = vmatpush1.msra.mxu0 0.0
        %1316 = vmatprep.subr.mxu0 0.0
        %1317 = vmatpush1.msra.mxu0 0.0
        %1318 = vmatprep.mubr.f32.mxu0 %v1245
        %1319 = vmatmul.mubr.f32.gmra.mrb[0].mxu0 %v1154
        %v1320 = vpop.f32.mrb[0].mxu0
        %v1321 = vadd.f32 0.0, %v1320
        %v1322 = vpop.f32.mrb[0].mxu0
        %1323 = vmatprep.mubr.f32.mxu0 %v1247
        %1324 = vmatmul.mubr.f32.gmra.mrb[0].mxu0 %v1182
        %v1325 = vpop.f32.mrb[0].mxu0
        %v1326 = vadd.f32 0.0, %v1325
        %v1327 = vpop.f32.mrb[0].mxu0
        %1328 = vmatprep.mubr.f32.mxu0 %v1249
        %1329 = vmatmul.mubr.f32.gmra.mrb[0].mxu0 %v1210
        %v1330 = vpop.f32.mrb[0].mxu0
        %v1331 = vadd.f32 0.0, %v1330
        %v1332 = vpop.f32.mrb[0].mxu0
        %1333 = vmatprep.mubr.f32.mxu0 %v1252
        %1334 = vmatmul.mubr.f32.gmra.mrb[0].mxu0 %v1244
        %v1335 = vpop.f32.mrb[0].mxu0
        %v1336 = vadd.f32 0.0, %v1335
        %v1337 = vpop.f32.mrb[0].mxu0
        %1338 = vdwg.mxu0
        %v1339 = vmax.f32 %v1109, %v1321
        %v1340 = vmax.f32 %v1114, %v1326
        %v1341 = vmax.f32 %v1119, %v1331
        %v1342 = vmax.f32 %v1124, %v1336
        %v1343 = vld [vmem:[%s4] sm:$0x1]
        %v1345 = vlaneseq
        %v1346 = vshrl.u32 %v1345, 7
        %v1347 = vsub.s32 0, %v1346
        %v1348 = vrot.slane %v1343, %v1347
        %v1350 = vadd.f32 %v1339, %v1348
        %v1351 = vadd.f32 %v1340, %v1348
        %v1352 = vadd.f32 %v1341, %v1348
        %v1353 = vadd.f32 %v1342, %v1348
        %v1354 = vmax.f32 %v1350, 0.0
        %v1355 = vmax.f32 %v1351, 0.0
        %v1356 = vmax.f32 %v1352, 0.0
        %v1357 = vmax.f32 %v1353, 0.0
        %v1359 = vrot.slane %v1354, 1
        %v1361 = vmax.f32 %v1354, %v1359
        %v1363 = vrot.slane %v1355, 1
        %v1365 = vmax.f32 %v1355, %v1363
        %v1367 = vrot.slane %v1356, 1
        %v1369 = vmax.f32 %v1356, %v1367
        %v1371 = vrot.slane %v1357, 1
        %v1373 = vmax.f32 %v1357, %v1371
        %v1375 = vrot.slane %v1361, 2
        %1376 = vrot.lane.b32.xlu0 %v1375, 32
        %v1377 = vpop.permute.xlu0 %1376
        %v1379 = vrot.slane %v1361, 4
        %1380 = vrot.lane.b32.xlu0 %v1379, 64
        %v1381 = vpop.permute.xlu0 %1380
        %v1383 = vrot.slane %v1361, 6
        %1384 = vrot.lane.b32.xlu0 %v1383, 96
        %v1385 = vpop.permute.xlu0 %1384
        %v1388 = vrot.slane %v1365, 2
        %1389 = vrot.lane.b32.xlu0 %v1388, 32
        %v1390 = vpop.permute.xlu0 %1389
        %v1392 = vrot.slane %v1365, 4
        %1393 = vrot.lane.b32.xlu0 %v1392, 64
        %v1394 = vpop.permute.xlu0 %1393
        %v1396 = vrot.slane %v1365, 6
        %1397 = vrot.lane.b32.xlu0 %v1396, 96
        %v1398 = vpop.permute.xlu0 %1397
        %v1401 = vrot.slane %v1369, 2
        %1402 = vrot.lane.b32.xlu0 %v1401, 32
        %v1403 = vpop.permute.xlu0 %1402
        %v1405 = vrot.slane %v1369, 4
        %1406 = vrot.lane.b32.xlu0 %v1405, 64
        %v1407 = vpop.permute.xlu0 %1406
        %v1409 = vrot.slane %v1369, 6
        %1410 = vrot.lane.b32.xlu0 %v1409, 96
        %v1411 = vpop.permute.xlu0 %1410
        %v1414 = vrot.slane %v1373, 2
        %1415 = vrot.lane.b32.xlu0 %v1414, 32
        %v1416 = vpop.permute.xlu0 %1415
        %v1418 = vrot.slane %v1373, 4
        %1419 = vrot.lane.b32.xlu0 %v1418, 64
        %v1420 = vpop.permute.xlu0 %1419
        %v1422 = vrot.slane %v1373, 6
        %1423 = vrot.lane.b32.xlu0 %v1422, 96
        %v1424 = vpop.permute.xlu0 %1423
        %v1426 = vsel %vm901, %v1361, %v1377
        %v1427 = vsel %vm905, %v1426, %v1381
        %v1428 = vsel %vm909, %v1427, %v1385
        %v1429 = vsel %vm901, %v1365, %v1390
        %v1430 = vsel %vm905, %v1429, %v1394
        %v1431 = vsel %vm909, %v1430, %v1398
        %v1432 = vsel %vm901, %v1369, %v1403
        %v1433 = vsel %vm905, %v1432, %v1407
        %v1434 = vsel %vm909, %v1433, %v1411
        %v1435 = vsel %vm901, %v1373, %v1416
        %v1436 = vsel %vm905, %v1435, %v1420
        %v1437 = vsel %vm909, %v1436, %v1424
        %v1438 = vld [vmem:[%s5] sm:$0xff]
        %v1439 = vld [vmem:[%s5 + $0x8] sm:$0xff]
        %v1440 = vld [vmem:[%s5 + $0x10] sm:$0xff]
        %v1441 = vld [vmem:[%s5 + $0x18] sm:$0xff]
        %v1442 = vld [vmem:[%s5 + $0x20] sm:$0xff]
        %v1443 = vld [vmem:[%s5 + $0x28] sm:$0xff]
        %v1444 = vld [vmem:[%s5 + $0x30] sm:$0xff]
        %v1445 = vld [vmem:[%s5 + $0x38] sm:$0xff]
        %v1446 = vld [vmem:[%s5 + $0x40] sm:$0xff]
        %v1447 = vld [vmem:[%s5 + $0x48] sm:$0xff]
        %v1448 = vld [vmem:[%s5 + $0x50] sm:$0xff]
        %v1449 = vld [vmem:[%s5 + $0x58] sm:$0xff]
        %v1450 = vld [vmem:[%s5 + $0x60] sm:$0xff]
        %v1451 = vld [vmem:[%s5 + $0x68] sm:$0xff]
        %v1452 = vld [vmem:[%s5 + $0x70] sm:$0xff]
        %v1453 = vld [vmem:[%s5 + $0x78] sm:$0xff]
        %v1454 = vld [vmem:[%s5 + $0x80] sm:$0xff]
        %v1455 = vld [vmem:[%s5 + $0x88] sm:$0xff]
        %v1456 = vld [vmem:[%s5 + $0x90] sm:$0xff]
        %v1457 = vld [vmem:[%s5 + $0x98] sm:$0xff]
        %v1458 = vld [vmem:[%s5 + $0xa0] sm:$0xff]
        %v1459 = vld [vmem:[%s5 + $0xa8] sm:$0xff]
        %v1460 = vld [vmem:[%s5 + $0xb0] sm:$0xff]
        %v1461 = vld [vmem:[%s5 + $0xb8] sm:$0xff]
        %v1462 = vld [vmem:[%s5 + $0xc0] sm:$0xff]
        %v1463 = vld [vmem:[%s5 + $0xc8] sm:$0xff]
        %v1464 = vld [vmem:[%s5 + $0xd0] sm:$0xff]
        %v1465 = vld [vmem:[%s5 + $0xd8] sm:$0xff]
        %v1466 = vld [vmem:[%s5 + $0xe0] sm:$0xff]
        %v1467 = vld [vmem:[%s5 + $0xe8] sm:$0xff]
        %v1468 = vld [vmem:[%s5 + $0xf0] sm:$0xff]
        %v1469 = vld [vmem:[%s5 + $0xf8] sm:$0xff]
        %v1470 = vld [vmem:[%s5 + $0x100] sm:$0xff]
        %v1471 = vld [vmem:[%s5 + $0x108] sm:$0xff]
        %v1472 = vld [vmem:[%s5 + $0x110] sm:$0xff]
        %v1473 = vld [vmem:[%s5 + $0x118] sm:$0xff]
        %v1474 = vld [vmem:[%s5 + $0x120] sm:$0xff]
        %v1475 = vld [vmem:[%s5 + $0x128] sm:$0xff]
        %v1476 = vld [vmem:[%s5 + $0x130] sm:$0xff]
        %v1477 = vld [vmem:[%s5 + $0x138] sm:$0xff]
        %v1478 = vld [vmem:[%s5 + $0x140] sm:$0xff]
        %v1479 = vld [vmem:[%s5 + $0x148] sm:$0xff]
        %v1480 = vld [vmem:[%s5 + $0x150] sm:$0xff]
        %v1481 = vld [vmem:[%s5 + $0x158] sm:$0xff]
        %v1482 = vld [vmem:[%s5 + $0x160] sm:$0xff]
        %v1483 = vld [vmem:[%s5 + $0x168] sm:$0xff]
        %v1484 = vld [vmem:[%s5 + $0x170] sm:$0xff]
        %v1485 = vld [vmem:[%s5 + $0x178] sm:$0xff]
        %v1486 = vld [vmem:[%s5 + $0x180] sm:$0xff]
        %v1487 = vld [vmem:[%s5 + $0x188] sm:$0xff]
        %v1488 = vld [vmem:[%s5 + $0x190] sm:$0xff]
        %v1489 = vld [vmem:[%s5 + $0x198] sm:$0xff]
        %v1490 = vld [vmem:[%s5 + $0x1a0] sm:$0xff]
        %v1491 = vld [vmem:[%s5 + $0x1a8] sm:$0xff]
        %v1492 = vld [vmem:[%s5 + $0x1b0] sm:$0xff]
        %v1493 = vld [vmem:[%s5 + $0x1b8] sm:$0xff]
        %v1494 = vld [vmem:[%s5 + $0x1c0] sm:$0xff]
        %v1495 = vld [vmem:[%s5 + $0x1c8] sm:$0xff]
        %v1496 = vld [vmem:[%s5 + $0x1d0] sm:$0xff]
        %v1497 = vld [vmem:[%s5 + $0x1d8] sm:$0xff]
        %v1498 = vld [vmem:[%s5 + $0x1e0] sm:$0xff]
        %v1499 = vld [vmem:[%s5 + $0x1e8] sm:$0xff]
        %v1500 = vld [vmem:[%s5 + $0x1f0] sm:$0xff]
        %v1501 = vld [vmem:[%s5 + $0x1f8] sm:$0xff]
        %v1502 = vld [vmem:[%s6] sm:$0x1]
        %1503 = vmatprep.subr.mxu0 0.0
        %1504 = vmatpush1.msra.mxu0 %v1438
        %1505 = vmatprep.subr.mxu0 0.0
        %1506 = vmatpush1.msra.mxu0 %v1439
        %1507 = vmatprep.subr.mxu0 0.0
        %1508 = vmatpush1.msra.mxu0 %v1440
        %1509 = vmatprep.subr.mxu0 0.0
        %1510 = vmatpush1.msra.mxu0 %v1441
        %1511 = vmatprep.subr.mxu0 0.0
        %1512 = vmatpush1.msra.mxu0 %v1442
        %1513 = vmatprep.subr.mxu0 0.0
        %1514 = vmatpush1.msra.mxu0 %v1443
        %1515 = vmatprep.subr.mxu0 0.0
        %1516 = vmatpush1.msra.mxu0 %v1444
        %1517 = vmatprep.subr.mxu0 0.0
        %1518 = vmatpush1.msra.mxu0 %v1445
        %1519 = vmatprep.subr.mxu0 0.0
        %1520 = vmatpush1.msra.mxu0 %v1446
        %1521 = vmatprep.subr.mxu0 0.0
        %1522 = vmatpush1.msra.mxu0 %v1447
        %1523 = vmatprep.subr.mxu0 0.0
        %1524 = vmatpush1.msra.mxu0 %v1448
        %1525 = vmatprep.subr.mxu0 0.0
        %1526 = vmatpush1.msra.mxu0 %v1449
        %1527 = vmatprep.subr.mxu0 0.0
        %1528 = vmatpush1.msra.mxu0 %v1450
        %1529 = vmatprep.subr.mxu0 0.0
        %1530 = vmatpush1.msra.mxu0 %v1451
        %1531 = vmatprep.subr.mxu0 0.0
        %1532 = vmatpush1.msra.mxu0 %v1452
        %1533 = vmatprep.subr.mxu0 0.0
        %1534 = vmatpush1.msra.mxu0 %v1453
        %1535 = vmatprep.subr.mxu0 0.0
        %1536 = vmatpush1.msra.mxu0 %v1454
        %1537 = vmatprep.subr.mxu0 0.0
        %1538 = vmatpush1.msra.mxu0 %v1455
        %1539 = vmatprep.subr.mxu0 0.0
        %1540 = vmatpush1.msra.mxu0 %v1456
        %1541 = vmatprep.subr.mxu0 0.0
        %1542 = vmatpush1.msra.mxu0 %v1457
        %1543 = vmatprep.subr.mxu0 0.0
        %1544 = vmatpush1.msra.mxu0 %v1458
        %1545 = vmatprep.subr.mxu0 0.0
        %1546 = vmatpush1.msra.mxu0 %v1459
        %1547 = vmatprep.subr.mxu0 0.0
        %1548 = vmatpush1.msra.mxu0 %v1460
        %1549 = vmatprep.subr.mxu0 0.0
        %1550 = vmatpush1.msra.mxu0 %v1461
        %1551 = vmatprep.subr.mxu0 0.0
        %1552 = vmatpush1.msra.mxu0 %v1462
        %1553 = vmatprep.subr.mxu0 0.0
        %1554 = vmatpush1.msra.mxu0 %v1463
        %1555 = vmatprep.subr.mxu0 0.0
        %1556 = vmatpush1.msra.mxu0 %v1464
        %1557 = vmatprep.subr.mxu0 0.0
        %1558 = vmatpush1.msra.mxu0 %v1465
        %1559 = vmatprep.subr.mxu0 0.0
        %1560 = vmatpush1.msra.mxu0 %v1466
        %1561 = vmatprep.subr.mxu0 0.0
        %1562 = vmatpush1.msra.mxu0 %v1467
        %1563 = vmatprep.subr.mxu0 0.0
        %1564 = vmatpush1.msra.mxu0 %v1468
        %1565 = vmatprep.subr.mxu0 0.0
        %1566 = vmatpush1.msra.mxu0 %v1469
        %1567 = vmatprep.mubr.f32.mxu0 %v1431
        %1568 = vmatmul.mubr.f32.gmra.mrb[0].mxu0 %v1428
        %v1569 = vpop.f32.mrb[0].mxu0
        %v1570 = vadd.f32 %v1502, %v1569
        %v1571 = vpop.f32.mrb[0].mxu0
        %1572 = vdwg.mxu0
        %1573 = vmatprep.subr.mxu0 0.0
        %1574 = vmatpush1.msra.mxu0 %v1470
        %1575 = vmatprep.subr.mxu0 0.0
        %1576 = vmatpush1.msra.mxu0 %v1471
        %1577 = vmatprep.subr.mxu0 0.0
        %1578 = vmatpush1.msra.mxu0 %v1472
        %1579 = vmatprep.subr.mxu0 0.0
        %1580 = vmatpush1.msra.mxu0 %v1473
        %1581 = vmatprep.subr.mxu0 0.0
        %1582 = vmatpush1.msra.mxu0 %v1474
        %1583 = vmatprep.subr.mxu0 0.0
        %1584 = vmatpush1.msra.mxu0 %v1475
        %1585 = vmatprep.subr.mxu0 0.0
        %1586 = vmatpush1.msra.mxu0 %v1476
        %1587 = vmatprep.subr.mxu0 0.0
        %1588 = vmatpush1.msra.mxu0 %v1477
        %1589 = vmatprep.subr.mxu0 0.0
        %1590 = vmatpush1.msra.mxu0 %v1478
        %1591 = vmatprep.subr.mxu0 0.0
        %1592 = vmatpush1.msra.mxu0 %v1479
        %1593 = vmatprep.subr.mxu0 0.0
        %1594 = vmatpush1.msra.mxu0 %v1480
        %1595 = vmatprep.subr.mxu0 0.0
        %1596 = vmatpush1.msra.mxu0 %v1481
        %1597 = vmatprep.subr.mxu0 0.0
        %1598 = vmatpush1.msra.mxu0 %v1482
        %1599 = vmatprep.subr.mxu0 0.0
        %1600 = vmatpush1.msra.mxu0 %v1483
        %1601 = vmatprep.subr.mxu0 0.0
        %1602 = vmatpush1.msra.mxu0 %v1484
        %1603 = vmatprep.subr.mxu0 0.0
        %1604 = vmatpush1.msra.mxu0 %v1485
        %1605 = vmatprep.subr.mxu0 0.0
        %1606 = vmatpush1.msra.mxu0 %v1486
        %1607 = vmatprep.subr.mxu0 0.0
        %1608 = vmatpush1.msra.mxu0 %v1487
        %1609 = vmatprep.subr.mxu0 0.0
        %1610 = vmatpush1.msra.mxu0 %v1488
        %1611 = vmatprep.subr.mxu0 0.0
        %1612 = vmatpush1.msra.mxu0 %v1489
        %1613 = vmatprep.subr.mxu0 0.0
        %1614 = vmatpush1.msra.mxu0 %v1490
        %1615 = vmatprep.subr.mxu0 0.0
        %1616 = vmatpush1.msra.mxu0 %v1491
        %1617 = vmatprep.subr.mxu0 0.0
        %1618 = vmatpush1.msra.mxu0 %v1492
        %1619 = vmatprep.subr.mxu0 0.0
        %1620 = vmatpush1.msra.mxu0 %v1493
        %1621 = vmatprep.subr.mxu0 0.0
        %1622 = vmatpush1.msra.mxu0 %v1494
        %1623 = vmatprep.subr.mxu0 0.0
        %1624 = vmatpush1.msra.mxu0 %v1495
        %1625 = vmatprep.subr.mxu0 0.0
        %1626 = vmatpush1.msra.mxu0 %v1496
        %1627 = vmatprep.subr.mxu0 0.0
        %1628 = vmatpush1.msra.mxu0 %v1497
        %1629 = vmatprep.subr.mxu0 0.0
        %1630 = vmatpush1.msra.mxu0 %v1498
        %1631 = vmatprep.subr.mxu0 0.0
        %1632 = vmatpush1.msra.mxu0 %v1499
        %1633 = vmatprep.subr.mxu0 0.0
        %1634 = vmatpush1.msra.mxu0 %v1500
        %1635 = vmatprep.subr.mxu0 0.0
        %1636 = vmatpush1.msra.mxu0 %v1501
        %1637 = vmatprep.mubr.f32.mxu0 %v1437
        %1638 = vmatmul.mubr.f32.gmra.mrb[0].mxu0 %v1434
        %v1639 = vpop.f32.mrb[0].mxu0
        %v1640 = vadd.f32 %v1570, %v1639
        %v1641 = vpop.f32.mrb[0].mxu0
        %1642 = vdwg.mxu0
        %v1643 = vmax.f32 %v1640, 0.0
        %v1644 = vld [vmem:[%s7] sm:$0xff]
        %v1645 = vld [vmem:[%s7 + $0x8] sm:$0xff]
        %v1646 = vld [vmem:[%s7 + $0x10] sm:$0xff]
        %v1647 = vld [vmem:[%s7 + $0x18] sm:$0xff]
        %v1648 = vld [vmem:[%s7 + $0x20] sm:$0xff]
        %v1649 = vld [vmem:[%s7 + $0x28] sm:$0xff]
        %v1650 = vld [vmem:[%s7 + $0x30] sm:$0xff]
        %v1651 = vld [vmem:[%s7 + $0x38] sm:$0xff]
        %v1652 = vld [vmem:[%s8] sm:$0x1]
        %v1654 = vsel %vm905, %v1643, 0
        %1656 = vmatprep.subr.mxu0 0.0
        %1657 = vmatpush1.msra.mxu0 %v1644
        %1658 = vmatprep.subr.mxu0 0.0
        %1659 = vmatpush1.msra.mxu0 %v1645
        %1660 = vmatprep.subr.mxu0 0.0
        %1661 = vmatpush1.msra.mxu0 %v1646
        %1662 = vmatprep.subr.mxu0 0.0
        %1663 = vmatpush1.msra.mxu0 %v1647
        %1664 = vmatprep.subr.mxu0 0.0
        %1665 = vmatpush1.msra.mxu0 %v1648
        %1666 = vmatprep.subr.mxu0 0.0
        %1667 = vmatpush1.msra.mxu0 %v1649
        %1668 = vmatprep.subr.mxu0 0.0
        %1669 = vmatpush1.msra.mxu0 %v1650
        %1670 = vmatprep.subr.mxu0 0.0
        %1671 = vmatpush1.msra.mxu0 %v1651
        %1672 = vmatprep.subr.mxu0 0.0
        %1673 = vmatpush1.msra.mxu0 0.0
        %1674 = vmatprep.subr.mxu0 0.0
        %1675 = vmatpush1.msra.mxu0 0.0
        %1676 = vmatprep.subr.mxu0 0.0
        %1677 = vmatpush1.msra.mxu0 0.0
        %1678 = vmatprep.subr.mxu0 0.0
        %1679 = vmatpush1.msra.mxu0 0.0
        %1680 = vmatprep.subr.mxu0 0.0
        %1681 = vmatpush1.msra.mxu0 0.0
        %1682 = vmatprep.subr.mxu0 0.0
        %1683 = vmatpush1.msra.mxu0 0.0
        %1684 = vmatprep.subr.mxu0 0.0
        %1685 = vmatpush1.msra.mxu0 0.0
        %1686 = vmatprep.subr.mxu0 0.0
        %1687 = vmatpush1.msra.mxu0 0.0
        %1688 = vmatprep.subr.mxu0 0.0
        %1689 = vmatpush1.msra.mxu0 0.0
        %1690 = vmatprep.subr.mxu0 0.0
        %1691 = vmatpush1.msra.mxu0 0.0
        %1692 = vmatprep.subr.mxu0 0.0
        %1693 = vmatpush1.msra.mxu0 0.0
        %1694 = vmatprep.subr.mxu0 0.0
        %1695 = vmatpush1.msra.mxu0 0.0
        %1696 = vmatprep.subr.mxu0 0.0
        %1697 = vmatpush1.msra.mxu0 0.0
        %1698 = vmatprep.subr.mxu0 0.0
        %1699 = vmatpush1.msra.mxu0 0.0
        %1700 = vmatprep.subr.mxu0 0.0
        %1701 = vmatpush1.msra.mxu0 0.0
        %1702 = vmatprep.subr.mxu0 0.0
        %1703 = vmatpush1.msra.mxu0 0.0
        %1704 = vmatprep.subr.mxu0 0.0
        %1705 = vmatpush1.msra.mxu0 0.0
        %1706 = vmatprep.subr.mxu0 0.0
        %1707 = vmatpush1.msra.mxu0 0.0
        %1708 = vmatprep.subr.mxu0 0.0
        %1709 = vmatpush1.msra.mxu0 0.0
        %1710 = vmatprep.subr.mxu0 0.0
        %1711 = vmatpush1.msra.mxu0 0.0
        %1712 = vmatprep.subr.mxu0 0.0
        %1713 = vmatpush1.msra.mxu0 0.0
        %1714 = vmatprep.subr.mxu0 0.0
        %1715 = vmatpush1.msra.mxu0 0.0
        %1716 = vmatprep.subr.mxu0 0.0
        %1717 = vmatpush1.msra.mxu0 0.0
        %1718 = vmatprep.subr.mxu0 0.0
        %1719 = vmatpush1.msra.mxu0 0.0
        %1720 = vmatprep.mubr.f32.mxu0 0.0
        %1721 = vmatmul.mubr.f32.gmra.mrb[0].mxu0 %v1654
        %v1722 = vpop.f32.mrb[0].mxu0
        %v1723 = vadd.f32 %v1652, %v1722
        %v1724 = vpop.f32.mrb[0].mxu0
        %1725 = vdwg.mxu0
        %v1726 = vmax.f32 %v1723, 0.0
        %v1727 = vld [vmem:[%s9] sm:$0xff]
        %v1728 = vld [vmem:[%s9 + $0x8] sm:$0xff]
        %v1729 = vld [vmem:[%s9 + $0x10] sm:$0xff]
        %v1730 = vld [vmem:[%s9 + $0x18] sm:$0xff]
        %v1731 = vld [vmem:[%s10] sm:$0x1]
        %v1733 = vsel %vm901, %v1726, 0
        %1735 = vmatprep.subr.mxu0 0.0
        %1736 = vmatpush1.msra.mxu0 %v1727
        %1737 = vmatprep.subr.mxu0 0.0
        %1738 = vmatpush1.msra.mxu0 %v1728
        %1739 = vmatprep.subr.mxu0 0.0
        %1740 = vmatpush1.msra.mxu0 %v1729
        %1741 = vmatprep.subr.mxu0 0.0
        %1742 = vmatpush1.msra.mxu0 %v1730
        %1743 = vmatprep.subr.mxu0 0.0
        %1744 = vmatpush1.msra.mxu0 0.0
        %1745 = vmatprep.subr.mxu0 0.0
        %1746 = vmatpush1.msra.mxu0 0.0
        %1747 = vmatprep.subr.mxu0 0.0
        %1748 = vmatpush1.msra.mxu0 0.0
        %1749 = vmatprep.subr.mxu0 0.0
        %1750 = vmatpush1.msra.mxu0 0.0
        %1751 = vmatprep.subr.mxu0 0.0
        %1752 = vmatpush1.msra.mxu0 0.0
        %1753 = vmatprep.subr.mxu0 0.0
        %1754 = vmatpush1.msra.mxu0 0.0
        %1755 = vmatprep.subr.mxu0 0.0
        %1756 = vmatpush1.msra.mxu0 0.0
        %1757 = vmatprep.subr.mxu0 0.0
        %1758 = vmatpush1.msra.mxu0 0.0
        %1759 = vmatprep.subr.mxu0 0.0
        %1760 = vmatpush1.msra.mxu0 0.0
        %1761 = vmatprep.subr.mxu0 0.0
        %1762 = vmatpush1.msra.mxu0 0.0
        %1763 = vmatprep.subr.mxu0 0.0
        %1764 = vmatpush1.msra.mxu0 0.0
        %1765 = vmatprep.subr.mxu0 0.0
        %1766 = vmatpush1.msra.mxu0 0.0
        %1767 = vmatprep.subr.mxu0 0.0
        %1768 = vmatpush1.msra.mxu0 0.0
        %1769 = vmatprep.subr.mxu0 0.0
        %1770 = vmatpush1.msra.mxu0 0.0
        %1771 = vmatprep.subr.mxu0 0.0
        %1772 = vmatpush1.msra.mxu0 0.0
        %1773 = vmatprep.subr.mxu0 0.0
        %1774 = vmatpush1.msra.mxu0 0.0
        %1775 = vmatprep.subr.mxu0 0.0
        %1776 = vmatpush1.msra.mxu0 0.0
        %1777 = vmatprep.subr.mxu0 0.0
        %1778 = vmatpush1.msra.mxu0 0.0
        %1779 = vmatprep.subr.mxu0 0.0
        %1780 = vmatpush1.msra.mxu0 0.0
        %1781 = vmatprep.subr.mxu0 0.0
        %1782 = vmatpush1.msra.mxu0 0.0
        %1783 = vmatprep.subr.mxu0 0.0
        %1784 = vmatpush1.msra.mxu0 0.0
        %1785 = vmatprep.subr.mxu0 0.0
        %1786 = vmatpush1.msra.mxu0 0.0
        %1787 = vmatprep.subr.mxu0 0.0
        %1788 = vmatpush1.msra.mxu0 0.0
        %1789 = vmatprep.subr.mxu0 0.0
        %1790 = vmatpush1.msra.mxu0 0.0
        %1791 = vmatprep.subr.mxu0 0.0
        %1792 = vmatpush1.msra.mxu0 0.0
        %1793 = vmatprep.subr.mxu0 0.0
        %1794 = vmatpush1.msra.mxu0 0.0
        %1795 = vmatprep.subr.mxu0 0.0
        %1796 = vmatpush1.msra.mxu0 0.0
        %1797 = vmatprep.subr.mxu0 0.0
        %1798 = vmatpush1.msra.mxu0 0.0
        %1799 = vmatprep.mubr.f32.mxu0 0.0
        %1800 = vmatmul.mubr.f32.gmra.mrb[0].mxu0 %v1733
        %v1801 = vpop.f32.mrb[0].mxu0
        %v1802 = vadd.f32 %v1731, %v1801
        %v1803 = vpop.f32.mrb[0].mxu0
        %1804 = vdwg.mxu0
        %vm1805 = vcmask 73728
        %1806 = vst.msk [vmem:[%s378] sm:$0x1] %vm1805, %v1802
        %s1807 = sand.u32 %s269, 1
        %s1808 = scalar_lea.sflag [#allocation4], %s1807
        %s1809 = sand.u32 %s269, 1
        %s1810 = scalar_lea.vmem [#allocation3], %s1809
        // Predicated region
        $region65: #{fused_forward.1} parent=63 // pred_check
          %p1811 = pneg %p279
        $region66: #{fused_forward.1} parent=63 // pred_check_branch
          %1813 = sbr.rel (%p1811) target = $region68
        $region67: #{fused_forward.1} parent=63 // pred_region
          %s1815 = ssub.s32 16, 16
          %1816 = vsyncadd %s1808, %s1815
          %s1817 = smul.addr %s25, 16
          %s1818 = scalar_lea.hbm %s11, %s1817
          %s1820 = sshll.u32 %s1810, 4
          %s1821 = int_to_ptr.vmem [resolvable:$true] %s1820
          %1823 = dma.vmem_to_hbm [thread:$0]  %s1821, 16, %s1818, %s1808
        $region68: #{fused_forward.1} parent=63 // pred_fallthru
          _
      $region64: #{fused_forward.1} parent=5 // pred_fallthru
        _
      %p1824 = scmp.le.s32.totalorder 2, %s20
      // Predicated region
      $region69: #{fused_forward.1} parent=5 // pred_check
        %p1825 = pneg %p1824
      $region70: #{fused_forward.1} parent=5 // pred_check_branch
        %1827 = sbr.rel (%p1825) target = $region72
      $region71: #{fused_forward.1} parent=5 // pred_region
        %s1828 = ssub.s32 %s20, 2
        // Predicated region
        $region73: #{fused_forward.1} parent=71 // pred_check
          %p1829 = pneg %p285
        $region74: #{fused_forward.1} parent=71 // pred_check_branch
          %1831 = sbr.rel (%p1829) target = $region76
        $region75: #{fused_forward.1} parent=71 // pred_region
          %s1832 = sand.u32 %s270, 1
          %s1833 = scalar_lea.sflag [#allocation4], %s1832
          %s1834 = sand.u32 %s270, 1
          %s1835 = scalar_lea.vmem [#allocation3], %s1834
          %1836 = dma.done %s1833, 16
        $region76: #{fused_forward.1} parent=71 // pred_fallthru
          _
      $region72: #{fused_forward.1} parent=5 // pred_fallthru
        _
    $region6: #{fused_forward.1} parent=1 // loop_footer
      %s24 = sadd.s32 1, %s20
    $region7: #{fused_forward.1} parent=1 // loop_footer_branch
      %19 = sbr.rel target = $region3
    $region8: #{fused_forward.1} parent=1 // loop_exit
      _
    %1837 = vsyncpa [#allocation4], 1
    %s1838 = scalar_lea.sflag [#allocation4], 1
    %1839 = vsyncpa %s1838, 1

</llo_original>
